<compile_context>
chip_gen: v5e
topology: v5e:2x2
jax: 0.10.0
libtpu: 0.0.40
codegen_flags: <defaults>
</compile_context>

<pallas_src>
import math

import jax
import jax.numpy as jnp
from jax import lax
from jax.experimental import pallas as pl
from jax.experimental.pallas import tpu as pltpu


# Contract over the last axis of both operands (q @ k^T without materializing
# the transpose of k).
_NT_DIMS = (((1,), (1,)), ((), ()))


# ------------------------------ fused MHA kernel ------------------------------

def _make_mha_kernel(num_heads, d_head, compute_dtype, with_attn):
    def kernel(xq_ref, xk_ref, xv_ref,
               wq_ref, wk_ref, wv_ref,
               bq_ref, bk_ref, bv_ref,
               *out_refs):
        ctx_ref = out_refs[0]
        attn_ref = out_refs[1] if with_attn else None

        # MXU operands in compute_dtype (bf16 on the hot path), f32 accumulate.
        xq = xq_ref[...].astype(compute_dtype)
        xk = xk_ref[...].astype(compute_dtype)
        xv = xv_ref[...].astype(compute_dtype)

        # ---- fused Q/K/V projections -------------------------------------
        # Weights are pre-transposed to (D_in, D_out) and 1/sqrt(d_head) is
        # folded into wq/bq, so there is no in-kernel transpose and no extra
        # q*scale multiply.  Bias add stays in f32.
        q = (jnp.dot(xq, wq_ref[...], preferred_element_type=jnp.float32)
             + bq_ref[...]).astype(compute_dtype)
        k = (jnp.dot(xk, wk_ref[...], preferred_element_type=jnp.float32)
             + bk_ref[...]).astype(compute_dtype)
        v = (jnp.dot(xv, wv_ref[...], preferred_element_type=jnp.float32)
             + bv_ref[...]).astype(compute_dtype)

        # ---- per-head scaled dot-product attention ------------------------
        for h in range(num_heads):
            sl = slice(h * d_head, (h + 1) * d_head)
            qh = q[:, sl]                       # (tq, dh)
            kh = k[:, sl]                       # (Sk, dh)
            vh = v[:, sl]                       # (Sk, dh)

            score = lax.dot_general(qh, kh, _NT_DIMS,
                                    preferred_element_type=jnp.float32)
            score_max = jnp.max(score, axis=-1, keepdims=True)
            p = jnp.exp(score - score_max)
            denom = jnp.sum(p, axis=-1, keepdims=True)
            # Exact reciprocal (attn can be a user-visible output).
            attn_h = p * pl.reciprocal(denom, approx=False)

            # Direct per-head column store (no concat -> registers freed now).
            ctx_ref[:, sl] = jnp.dot(attn_h.astype(compute_dtype), vh,
                                     preferred_element_type=jnp.float32
                                     ).astype(ctx_ref.dtype)
            if with_attn:
                attn_ref[h] = attn_h.astype(attn_ref.dtype)

    return kernel


# ------------------------------ parameter prep --------------------------------

def prepare_mha_params(params, num_heads, compute_dtype=jnp.bfloat16):
    """One-time prep (do NOT call per forward): transpose weights, fold the
    attention scale into wq/bq, cast weights to the MXU compute dtype."""
    dim = params["wq"].shape[0]
    assert dim % num_heads == 0
    inv_scale = 1.0 / math.sqrt(dim // num_heads)
    return {
        "wq": (params["wq"].T * inv_scale).astype(compute_dtype),
        "wk": params["wk"].T.astype(compute_dtype),
        "wv": params["wv"].T.astype(compute_dtype),
        "bq": (params["bq"] * inv_scale).astype(jnp.float32),
        "bk": params["bk"].astype(jnp.float32),
        "bv": params["bv"].astype(jnp.float32),
    }


# --------------------------------- helpers ------------------------------------

def _pick_q_tile(sq):
    """Largest Sq tile <= 256 that divides Sq and keeps (8,128) legality
    (multiple of 8 or the full extent)."""
    if sq <= 256:
        return sq
    for t in (256, 128, 64, 32, 16, 8):
        if sq % t == 0:
            return t
    return sq


def _vmem_limit_bytes(D, tq, Sk, num_heads, in_isz, w_isz, attn_isz,
                      with_attn, buffered_weights):
    wbuf = 1 if buffered_weights else 2
    weights = 3 * D * D * w_isz * wbuf + 3 * D * 4 * wbuf
    io = 2 * ((tq + 2 * Sk) * D * in_isz + tq * D * in_isz)     # double-buffered
    attn = 2 * num_heads * tq * Sk * attn_isz if with_attn else 0
    temps = (tq + 2 * Sk) * D * 4 + 3 * tq * Sk * 4             # q/k/v + score
    est = weights + io + attn + temps
    # 2x safety + headroom; floor so v5e (16 MiB default scope) admits the
    # pipeline, cap well under v6e physical (and tiling is required anyway
    # once the estimate approaches v7x's 64 MiB).
    return int(min(max(2 * est + (8 << 20), 32 << 20), 100 << 20))


# --------------------------------- wrapper -------------------------------------

def multi_head_attention(prep, query, key, value, num_heads, *,
                         return_attn=True):
    """prep: output of prepare_mha_params. query/key/value: (B, S, D).
    Returns (context (B, Sq, D), attn (num_heads*B, Sq, Sk) or None).
    Pass return_attn=False on production hot paths to skip the attention-prob
    HBM writeback."""
    B, Sq, D = query.shape
    _, Sk, _ = key.shape
    assert D % num_heads == 0
    d_head = D // num_heads
    compute_dtype = prep["wq"].dtype

    tq = _pick_q_tile(Sq)
    n_qt = Sq // tq

    kernel = _make_mha_kernel(num_heads, d_head, compute_dtype, return_attn)

    ctx_shape = jax.ShapeDtypeStruct((B, Sq, D), query.dtype)
    if return_attn:
        # Head-major so the final (H*B, Sq, Sk) view is a free reshape.
        out_shape = (ctx_shape,
                     jax.ShapeDtypeStruct((num_heads, B, Sq, Sk), query.dtype))
    else:
        out_shape = ctx_shape

    def run(buffered_weights):
        if buffered_weights:
            # Grid-invariant weights/biases: a single VMEM buffer instead of
            # the default double buffer (halves weight VMEM; matters on v7x).
            pm = pl.Buffered(1)
            const_spec = lambda shp: pl.BlockSpec(shp, lambda b, qi: (0, 0),
                                                  pipeline_mode=pm)
        else:
            const_spec = lambda shp: pl.BlockSpec(shp, lambda b, qi: (0, 0))

        ctx_spec = pl.BlockSpec((None, tq, D), lambda b, qi: (b, qi, 0))
        if return_attn:
            out_specs = (ctx_spec,
                         pl.BlockSpec((num_heads, None, tq, Sk),
                                      lambda b, qi: (0, b, qi, 0)))
        else:
            out_specs = ctx_spec

        return pl.pallas_call(
            kernel,
            out_shape=out_shape,
            grid_spec=pltpu.PrefetchScalarGridSpec(
                num_scalar_prefetch=0,
                grid=(B, n_qt),
                in_specs=[
                    pl.BlockSpec((None, tq, D), lambda b, qi: (b, qi, 0)),  # q
                    pl.BlockSpec((None, Sk, D), lambda b, qi: (b, 0, 0)),   # k
                    pl.BlockSpec((None, Sk, D), lambda b, qi: (b, 0, 0)),   # v
                    const_spec((D, D)),   # wq^T (scale folded)
                    const_spec((D, D)),   # wk^T
                    const_spec((D, D)),   # wv^T
                    const_spec((1, D)),   # bq (scale folded)
                    const_spec((1, D)),   # bk
                    const_spec((1, D)),   # bv
                ],
                out_specs=out_specs,
            ),
            compiler_params=pltpu.CompilerParams(
                dimension_semantics=("parallel", "parallel"),
                vmem_limit_bytes=_vmem_limit_bytes(
                    D, tq, Sk, num_heads,
                    jnp.dtype(query.dtype).itemsize,
                    jnp.dtype(compute_dtype).itemsize,
                    jnp.dtype(query.dtype).itemsize,
                    return_attn, buffered_weights)),
        )(query, key, value,
          prep["wq"], prep["wk"], prep["wv"],
          prep["bq"], prep["bk"], prep["bv"])

    try:
        result = run(buffered_weights=True)
    except Exception:
        # Fallback for jax/Mosaic versions without single-buffer pipeline_mode.
        result = run(buffered_weights=False)

    if return_attn:
        ctx, attn = result
        # (H, B, Sq, Sk) -> (H*B, Sq, Sk): contiguous, matches the PyTorch
        # module's (head * batch + b) flattened ordering.
        return ctx, attn.reshape(num_heads * B, Sq, Sk)
    return result, None


# ------------------------------- parameter init --------------------------------

def init_mha_params(key, dim):
    """Deterministic init (torch.nn.Linear-style uniform bounds)."""
    bound = 1.0 / math.sqrt(dim)
    ks = jax.random.split(key, 6)

    def u(k, shape):
        return jax.random.uniform(k, shape, jnp.float32, -bound, bound)

    return {
        "wq": u(ks[0], (dim, dim)), "bq": u(ks[1], (1, dim)),
        "wk": u(ks[2], (dim, dim)), "bk": u(ks[3], (1, dim)),
        "wv": u(ks[4], (dim, dim)), "bv": u(ks[5], (1, dim)),
    }


# ------------------------------ pure-JAX reference ------------------------------

def _reference(params, query, key, value, num_heads):
    B, Sq, D = query.shape
    d_head = D // num_heads

    def lin(x, w, b):
        return x @ w.T + b

    def split_heads(x):
        S = x.shape[1]
        x = x.reshape(B, S, num_heads, d_head)
        return jnp.transpose(x, (2, 0, 1, 3)).reshape(num_heads * B, S, d_head)

    q = split_heads(lin(query, params["wq"], params["bq"]))
    k = split_heads(lin(key, params["wk"], params["bk"]))
    v = split_heads(lin(value, params["wv"], params["bv"]))
    score = jnp.einsum("bqd,bkd->bqk", q, k) / math.sqrt(d_head)
    attn = jax.nn.softmax(score, axis=-1)
    ctx = jnp.einsum("bqk,bkd->bqd", attn, v)
    ctx = ctx.reshape(num_heads, B, Sq, d_head)
    ctx = jnp.transpose(ctx, (1, 2, 0, 3)).reshape(B, Sq, D)
    return ctx, attn


# -------------------------------------- main --------------------------------------

if __name__ == "__main__":
    batch, seq, dim, num_heads = 2, 8, 32, 4

    root = jax.random.PRNGKey(0)
    k_params, k_q, k_k, k_v = jax.random.split(root, 4)

    params = init_mha_params(k_params, dim)
    query = jax.random.normal(k_q, (batch, seq, dim), jnp.float32)
    key_t = jax.random.normal(k_k, (batch, seq, dim), jnp.float32)
    value = jax.random.normal(k_v, (batch, seq, dim), jnp.float32)

    ctx_ref, attn_ref = _reference(params, query, key_t, value, num_heads)

    # --- exact (f32 MXU) path: tight check --------------------------------
    prep32 = prepare_mha_params(params, num_heads, compute_dtype=jnp.float32)
    ctx, attn = multi_head_attention(prep32, query, key_t, value, num_heads,
                                     return_attn=True)
    ctx = jax.block_until_ready(ctx)
    attn = jax.block_until_ready(attn)
    assert ctx.shape == (batch, seq, dim)
    assert attn.shape == (batch * num_heads, seq, seq)
    assert jnp.allclose(ctx, ctx_ref, atol=1e-4, rtol=1e-4)
    assert jnp.allclose(attn, attn_ref, atol=1e-4, rtol=1e-4)

    # --- hot path without the attention-prob writeback ---------------------
    ctx_only, attn_none = multi_head_attention(prep32, query, key_t, value,
                                               num_heads, return_attn=False)
    ctx_only = jax.block_until_ready(ctx_only)
    assert attn_none is None
    assert jnp.allclose(ctx_only, ctx_ref, atol=1e-4, rtol=1e-4)

    # --- bf16 MXU hot path: looser check -----------------------------------
    prep16 = prepare_mha_params(params, num_heads, compute_dtype=jnp.bfloat16)
    ctx16, attn16 = multi_head_attention(prep16, query, key_t, value,
                                         num_heads, return_attn=True)
    ctx16 = jax.block_until_ready(ctx16)
    attn16 = jax.block_until_ready(attn16)
    assert jnp.allclose(ctx16, ctx_ref, atol=3e-2, rtol=5e-2)
    assert jnp.allclose(attn16, attn_ref, atol=3e-2, rtol=5e-2)

    print("KERNEL_OK")
</pallas_src>

<mosaic_0001>
module attributes {stable_mosaic.version = 11 : i64} {
  func.func @kernel(%arg0: i32, %arg1: i32, %arg2: memref<1x8x32xf32, #tpu.memory_space<vmem>>, %arg3: memref<1x8x32xf32, #tpu.memory_space<vmem>>, %arg4: memref<1x8x32xf32, #tpu.memory_space<vmem>>, %arg5: memref<32x32xf32, #tpu.memory_space<vmem>>, %arg6: memref<32x32xf32, #tpu.memory_space<vmem>>, %arg7: memref<32x32xf32, #tpu.memory_space<vmem>>, %arg8: memref<1x32xf32, #tpu.memory_space<vmem>>, %arg9: memref<1x32xf32, #tpu.memory_space<vmem>>, %arg10: memref<1x32xf32, #tpu.memory_space<vmem>>, %arg11: memref<1x8x32xf32, #tpu.memory_space<vmem>>, %arg12: memref<4x1x8x8xf32, #tpu.memory_space<vmem>>) attributes {dimension_semantics = [#tpu.dimension_semantics<parallel>, #tpu.dimension_semantics<parallel>], iteration_bounds = array<i64: 2, 1>, scalar_prefetch = 0 : i64, scratch_operands = 0 : i64, tpu.core_type = #tpu.core_type<tc>, window_params = [{transform_indices = @transform_0, window_bounds = array<i64: 1, 8, 32>}, {transform_indices = @transform_1, window_bounds = array<i64: 1, 8, 32>}, {transform_indices = @transform_2, window_bounds = array<i64: 1, 8, 32>}, {pipeline_mode = #tpu.pipeline_mode<synchronous>, transform_indices = @transform_3, window_bounds = array<i64: 32, 32>}, {pipeline_mode = #tpu.pipeline_mode<synchronous>, transform_indices = @transform_4, window_bounds = array<i64: 32, 32>}, {pipeline_mode = #tpu.pipeline_mode<synchronous>, transform_indices = @transform_5, window_bounds = array<i64: 32, 32>}, {pipeline_mode = #tpu.pipeline_mode<synchronous>, transform_indices = @transform_6, window_bounds = array<i64: 1, 32>}, {pipeline_mode = #tpu.pipeline_mode<synchronous>, transform_indices = @transform_7, window_bounds = array<i64: 1, 32>}, {pipeline_mode = #tpu.pipeline_mode<synchronous>, transform_indices = @transform_8, window_bounds = array<i64: 1, 32>}, {transform_indices = @transform_9, window_bounds = array<i64: 1, 8, 32>}, {transform_indices = @transform_10, window_bounds = array<i64: 4, 1, 8, 8>}]} {
    %c0 = arith.constant 0 : index
    %c0_0 = arith.constant 0 : index
    %c0_1 = arith.constant 0 : index
    %0 = vector.load %arg2[%c0, %c0_0, %c0_1] : memref<1x8x32xf32, #tpu.memory_space<vmem>>, vector<1x8x32xf32>
    %1 = vector.shape_cast %0 : vector<1x8x32xf32> to vector<8x32xf32>
    %c0_2 = arith.constant 0 : index
    %c0_3 = arith.constant 0 : index
    %c0_4 = arith.constant 0 : index
    %2 = vector.load %arg3[%c0_2, %c0_3, %c0_4] : memref<1x8x32xf32, #tpu.memory_space<vmem>>, vector<1x8x32xf32>
    %3 = vector.shape_cast %2 : vector<1x8x32xf32> to vector<8x32xf32>
    %c0_5 = arith.constant 0 : index
    %c0_6 = arith.constant 0 : index
    %c0_7 = arith.constant 0 : index
    %4 = vector.load %arg4[%c0_5, %c0_6, %c0_7] : memref<1x8x32xf32, #tpu.memory_space<vmem>>, vector<1x8x32xf32>
    %5 = vector.shape_cast %4 : vector<1x8x32xf32> to vector<8x32xf32>
    %c0_8 = arith.constant 0 : index
    %c0_9 = arith.constant 0 : index
    %6 = vector.load %arg5[%c0_8, %c0_9] : memref<32x32xf32, #tpu.memory_space<vmem>>, vector<32x32xf32>
    %cst = arith.constant dense<0.000000e+00> : vector<8x32xf32>
    %7 = tpu.matmul %1, %6, %cst {dimension_numbers = #tpu.dot_dimension_numbers<[1], [0], [0], [1], [0, 0, 1, 1], [], []>} : vector<8x32xf32>, vector<32x32xf32>, vector<8x32xf32> -> vector<8x32xf32>
    %c0_10 = arith.constant 0 : index
    %c0_11 = arith.constant 0 : index
    %8 = vector.load %arg8[%c0_10, %c0_11] : memref<1x32xf32, #tpu.memory_space<vmem>>, vector<1x32xf32>
    %9 = vector.broadcast %8 : vector<1x32xf32> to vector<8x32xf32>
    %10 = arith.addf %7, %9 : vector<8x32xf32>
    %c0_12 = arith.constant 0 : index
    %c0_13 = arith.constant 0 : index
    %11 = vector.load %arg6[%c0_12, %c0_13] : memref<32x32xf32, #tpu.memory_space<vmem>>, vector<32x32xf32>
    %cst_14 = arith.constant dense<0.000000e+00> : vector<8x32xf32>
    %12 = tpu.matmul %3, %11, %cst_14 {dimension_numbers = #tpu.dot_dimension_numbers<[1], [0], [0], [1], [0, 0, 1, 1], [], []>} : vector<8x32xf32>, vector<32x32xf32>, vector<8x32xf32> -> vector<8x32xf32>
    %c0_15 = arith.constant 0 : index
    %c0_16 = arith.constant 0 : index
    %13 = vector.load %arg9[%c0_15, %c0_16] : memref<1x32xf32, #tpu.memory_space<vmem>>, vector<1x32xf32>
    %14 = vector.broadcast %13 : vector<1x32xf32> to vector<8x32xf32>
    %15 = arith.addf %12, %14 : vector<8x32xf32>
    %c0_17 = arith.constant 0 : index
    %c0_18 = arith.constant 0 : index
    %16 = vector.load %arg7[%c0_17, %c0_18] : memref<32x32xf32, #tpu.memory_space<vmem>>, vector<32x32xf32>
    %cst_19 = arith.constant dense<0.000000e+00> : vector<8x32xf32>
    %17 = tpu.matmul %5, %16, %cst_19 {dimension_numbers = #tpu.dot_dimension_numbers<[1], [0], [0], [1], [0, 0, 1, 1], [], []>} : vector<8x32xf32>, vector<32x32xf32>, vector<8x32xf32> -> vector<8x32xf32>
    %c0_20 = arith.constant 0 : index
    %c0_21 = arith.constant 0 : index
    %18 = vector.load %arg10[%c0_20, %c0_21] : memref<1x32xf32, #tpu.memory_space<vmem>>, vector<1x32xf32>
    %19 = vector.broadcast %18 : vector<1x32xf32> to vector<8x32xf32>
    %20 = arith.addf %17, %19 : vector<8x32xf32>
    %21 = vector.extract_strided_slice %10 {offsets = [0, 0], sizes = [8, 8], strides = [1, 1]} : vector<8x32xf32> to vector<8x8xf32>
    %22 = vector.extract_strided_slice %15 {offsets = [0, 0], sizes = [8, 8], strides = [1, 1]} : vector<8x32xf32> to vector<8x8xf32>
    %23 = vector.extract_strided_slice %20 {offsets = [0, 0], sizes = [8, 8], strides = [1, 1]} : vector<8x32xf32> to vector<8x8xf32>
    %cst_22 = arith.constant dense<0.000000e+00> : vector<8x8xf32>
    %24 = tpu.matmul %21, %22, %cst_22 {dimension_numbers = #tpu.dot_dimension_numbers<[1], [1], [0], [0], [0, 0, 1, 0], [], []>} : vector<8x8xf32>, vector<8x8xf32>, vector<8x8xf32> -> vector<8x8xf32>
    %cst_23 = arith.constant dense<0xFF800000> : vector<8xf32>
    %25 = vector.multi_reduction <maximumf>, %24, %cst_23 [1] : vector<8x8xf32> to vector<8xf32>
    %26 = vector.shape_cast %25 : vector<8xf32> to vector<8x1xf32>
    %27 = vector.broadcast %26 : vector<8x1xf32> to vector<8x8xf32>
    %28 = arith.subf %24, %27 : vector<8x8xf32>
    %29 = math.exp %28 : vector<8x8xf32>
    %cst_24 = arith.constant dense<0.000000e+00> : vector<8xf32>
    %30 = vector.multi_reduction <add>, %29, %cst_24 [1] : vector<8x8xf32> to vector<8xf32>
    %31 = vector.shape_cast %30 : vector<8xf32> to vector<8x1xf32>
    %32 = tpu.reciprocal %31 : vector<8x1xf32> -> vector<8x1xf32>
    %33 = vector.broadcast %32 : vector<8x1xf32> to vector<8x8xf32>
    %34 = arith.mulf %29, %33 : vector<8x8xf32>
    %cst_25 = arith.constant dense<0.000000e+00> : vector<8x8xf32>
    %35 = tpu.matmul %34, %23, %cst_25 {dimension_numbers = #tpu.dot_dimension_numbers<[1], [0], [0], [1], [0, 0, 1, 1], [], []>} : vector<8x8xf32>, vector<8x8xf32>, vector<8x8xf32> -> vector<8x8xf32>
    %c0_26 = arith.constant 0 : index
    %c0_27 = arith.constant 0 : index
    %c0_28 = arith.constant 0 : index
    %36 = vector.load %arg11[%c0_26, %c0_27, %c0_28] : memref<1x8x32xf32, #tpu.memory_space<vmem>>, vector<1x8x8xf32>
    %37 = vector.shape_cast %36 : vector<1x8x8xf32> to vector<8x8xf32>
    %38 = vector.shape_cast %35 : vector<8x8xf32> to vector<1x8x8xf32>
    tpu.vector_store %arg11[%c0_26, %c0_27, %c0_28], %38 {strides = array<i32>} : memref<1x8x32xf32, #tpu.memory_space<vmem>>, vector<1x8x8xf32>,
    %c0_29 = arith.constant 0 : index
    %c0_30 = arith.constant 0 : index
    %c0_31 = arith.constant 0 : index
    %c0_32 = arith.constant 0 : index
    %39 = vector.load %arg12[%c0_29, %c0_30, %c0_31, %c0_32] : memref<4x1x8x8xf32, #tpu.memory_space<vmem>>, vector<1x1x8x8xf32>
    %40 = vector.shape_cast %39 : vector<1x1x8x8xf32> to vector<8x8xf32>
    %41 = vector.shape_cast %34 : vector<8x8xf32> to vector<1x1x8x8xf32>
    tpu.vector_store %arg12[%c0_29, %c0_30, %c0_31, %c0_32], %41 {strides = array<i32>} : memref<4x1x8x8xf32, #tpu.memory_space<vmem>>, vector<1x1x8x8xf32>,
    %42 = vector.extract_strided_slice %10 {offsets = [0, 8], sizes = [8, 8], strides = [1, 1]} : vector<8x32xf32> to vector<8x8xf32>
    %43 = vector.extract_strided_slice %15 {offsets = [0, 8], sizes = [8, 8], strides = [1, 1]} : vector<8x32xf32> to vector<8x8xf32>
    %44 = vector.extract_strided_slice %20 {offsets = [0, 8], sizes = [8, 8], strides = [1, 1]} : vector<8x32xf32> to vector<8x8xf32>
    %cst_33 = arith.constant dense<0.000000e+00> : vector<8x8xf32>
    %45 = tpu.matmul %42, %43, %cst_33 {dimension_numbers = #tpu.dot_dimension_numbers<[1], [1], [0], [0], [0, 0, 1, 0], [], []>} : vector<8x8xf32>, vector<8x8xf32>, vector<8x8xf32> -> vector<8x8xf32>
    %cst_34 = arith.constant dense<0xFF800000> : vector<8xf32>
    %46 = vector.multi_reduction <maximumf>, %45, %cst_34 [1] : vector<8x8xf32> to vector<8xf32>
    %47 = vector.shape_cast %46 : vector<8xf32> to vector<8x1xf32>
    %48 = vector.broadcast %47 : vector<8x1xf32> to vector<8x8xf32>
    %49 = arith.subf %45, %48 : vector<8x8xf32>
    %50 = math.exp %49 : vector<8x8xf32>
    %cst_35 = arith.constant dense<0.000000e+00> : vector<8xf32>
    %51 = vector.multi_reduction <add>, %50, %cst_35 [1] : vector<8x8xf32> to vector<8xf32>
    %52 = vector.shape_cast %51 : vector<8xf32> to vector<8x1xf32>
    %53 = tpu.reciprocal %52 : vector<8x1xf32> -> vector<8x1xf32>
    %54 = vector.broadcast %53 : vector<8x1xf32> to vector<8x8xf32>
    %55 = arith.mulf %50, %54 : vector<8x8xf32>
    %cst_36 = arith.constant dense<0.000000e+00> : vector<8x8xf32>
    %56 = tpu.matmul %55, %44, %cst_36 {dimension_numbers = #tpu.dot_dimension_numbers<[1], [0], [0], [1], [0, 0, 1, 1], [], []>} : vector<8x8xf32>, vector<8x8xf32>, vector<8x8xf32> -> vector<8x8xf32>
    %c0_37 = arith.constant 0 : index
    %c0_38 = arith.constant 0 : index
    %c8 = arith.constant 8 : index
    %57 = vector.load %arg11[%c0_37, %c0_38, %c8] : memref<1x8x32xf32, #tpu.memory_space<vmem>>, vector<1x8x8xf32>
    %58 = vector.shape_cast %57 : vector<1x8x8xf32> to vector<8x8xf32>
    %59 = vector.shape_cast %56 : vector<8x8xf32> to vector<1x8x8xf32>
    tpu.vector_store %arg11[%c0_37, %c0_38, %c8], %59 {strides = array<i32>} : memref<1x8x32xf32, #tpu.memory_space<vmem>>, vector<1x8x8xf32>,
    %c1 = arith.constant 1 : index
    %c0_39 = arith.constant 0 : index
    %c0_40 = arith.constant 0 : index
    %c0_41 = arith.constant 0 : index
    %60 = vector.load %arg12[%c1, %c0_39, %c0_40, %c0_41] : memref<4x1x8x8xf32, #tpu.memory_space<vmem>>, vector<1x1x8x8xf32>
    %61 = vector.shape_cast %60 : vector<1x1x8x8xf32> to vector<8x8xf32>
    %62 = vector.shape_cast %55 : vector<8x8xf32> to vector<1x1x8x8xf32>
    tpu.vector_store %arg12[%c1, %c0_39, %c0_40, %c0_41], %62 {strides = array<i32>} : memref<4x1x8x8xf32, #tpu.memory_space<vmem>>, vector<1x1x8x8xf32>,
    %63 = vector.extract_strided_slice %10 {offsets = [0, 16], sizes = [8, 8], strides = [1, 1]} : vector<8x32xf32> to vector<8x8xf32>
    %64 = vector.extract_strided_slice %15 {offsets = [0, 16], sizes = [8, 8], strides = [1, 1]} : vector<8x32xf32> to vector<8x8xf32>
    %65 = vector.extract_strided_slice %20 {offsets = [0, 16], sizes = [8, 8], strides = [1, 1]} : vector<8x32xf32> to vector<8x8xf32>
    %cst_42 = arith.constant dense<0.000000e+00> : vector<8x8xf32>
    %66 = tpu.matmul %63, %64, %cst_42 {dimension_numbers = #tpu.dot_dimension_numbers<[1], [1], [0], [0], [0, 0, 1, 0], [], []>} : vector<8x8xf32>, vector<8x8xf32>, vector<8x8xf32> -> vector<8x8xf32>
    %cst_43 = arith.constant dense<0xFF800000> : vector<8xf32>
    %67 = vector.multi_reduction <maximumf>, %66, %cst_43 [1] : vector<8x8xf32> to vector<8xf32>
    %68 = vector.shape_cast %67 : vector<8xf32> to vector<8x1xf32>
    %69 = vector.broadcast %68 : vector<8x1xf32> to vector<8x8xf32>
    %70 = arith.subf %66, %69 : vector<8x8xf32>
    %71 = math.exp %70 : vector<8x8xf32>
    %cst_44 = arith.constant dense<0.000000e+00> : vector<8xf32>
    %72 = vector.multi_reduction <add>, %71, %cst_44 [1] : vector<8x8xf32> to vector<8xf32>
    %73 = vector.shape_cast %72 : vector<8xf32> to vector<8x1xf32>
    %74 = tpu.reciprocal %73 : vector<8x1xf32> -> vector<8x1xf32>
    %75 = vector.broadcast %74 : vector<8x1xf32> to vector<8x8xf32>
    %76 = arith.mulf %71, %75 : vector<8x8xf32>
    %cst_45 = arith.constant dense<0.000000e+00> : vector<8x8xf32>
    %77 = tpu.matmul %76, %65, %cst_45 {dimension_numbers = #tpu.dot_dimension_numbers<[1], [0], [0], [1], [0, 0, 1, 1], [], []>} : vector<8x8xf32>, vector<8x8xf32>, vector<8x8xf32> -> vector<8x8xf32>
    %c0_46 = arith.constant 0 : index
    %c0_47 = arith.constant 0 : index
    %c16 = arith.constant 16 : index
    %78 = vector.load %arg11[%c0_46, %c0_47, %c16] : memref<1x8x32xf32, #tpu.memory_space<vmem>>, vector<1x8x8xf32>
    %79 = vector.shape_cast %78 : vector<1x8x8xf32> to vector<8x8xf32>
    %80 = vector.shape_cast %77 : vector<8x8xf32> to vector<1x8x8xf32>
    tpu.vector_store %arg11[%c0_46, %c0_47, %c16], %80 {strides = array<i32>} : memref<1x8x32xf32, #tpu.memory_space<vmem>>, vector<1x8x8xf32>,
    %c2 = arith.constant 2 : index
    %c0_48 = arith.constant 0 : index
    %c0_49 = arith.constant 0 : index
    %c0_50 = arith.constant 0 : index
    %81 = vector.load %arg12[%c2, %c0_48, %c0_49, %c0_50] : memref<4x1x8x8xf32, #tpu.memory_space<vmem>>, vector<1x1x8x8xf32>
    %82 = vector.shape_cast %81 : vector<1x1x8x8xf32> to vector<8x8xf32>
    %83 = vector.shape_cast %76 : vector<8x8xf32> to vector<1x1x8x8xf32>
    tpu.vector_store %arg12[%c2, %c0_48, %c0_49, %c0_50], %83 {strides = array<i32>} : memref<4x1x8x8xf32, #tpu.memory_space<vmem>>, vector<1x1x8x8xf32>,
    %84 = vector.extract_strided_slice %10 {offsets = [0, 24], sizes = [8, 8], strides = [1, 1]} : vector<8x32xf32> to vector<8x8xf32>
    %85 = vector.extract_strided_slice %15 {offsets = [0, 24], sizes = [8, 8], strides = [1, 1]} : vector<8x32xf32> to vector<8x8xf32>
    %86 = vector.extract_strided_slice %20 {offsets = [0, 24], sizes = [8, 8], strides = [1, 1]} : vector<8x32xf32> to vector<8x8xf32>
    %cst_51 = arith.constant dense<0.000000e+00> : vector<8x8xf32>
    %87 = tpu.matmul %84, %85, %cst_51 {dimension_numbers = #tpu.dot_dimension_numbers<[1], [1], [0], [0], [0, 0, 1, 0], [], []>} : vector<8x8xf32>, vector<8x8xf32>, vector<8x8xf32> -> vector<8x8xf32>
    %cst_52 = arith.constant dense<0xFF800000> : vector<8xf32>
    %88 = vector.multi_reduction <maximumf>, %87, %cst_52 [1] : vector<8x8xf32> to vector<8xf32>
    %89 = vector.shape_cast %88 : vector<8xf32> to vector<8x1xf32>
    %90 = vector.broadcast %89 : vector<8x1xf32> to vector<8x8xf32>
    %91 = arith.subf %87, %90 : vector<8x8xf32>
    %92 = math.exp %91 : vector<8x8xf32>
    %cst_53 = arith.constant dense<0.000000e+00> : vector<8xf32>
    %93 = vector.multi_reduction <add>, %92, %cst_53 [1] : vector<8x8xf32> to vector<8xf32>
    %94 = vector.shape_cast %93 : vector<8xf32> to vector<8x1xf32>
    %95 = tpu.reciprocal %94 : vector<8x1xf32> -> vector<8x1xf32>
    %96 = vector.broadcast %95 : vector<8x1xf32> to vector<8x8xf32>
    %97 = arith.mulf %92, %96 : vector<8x8xf32>
    %cst_54 = arith.constant dense<0.000000e+00> : vector<8x8xf32>
    %98 = tpu.matmul %97, %86, %cst_54 {dimension_numbers = #tpu.dot_dimension_numbers<[1], [0], [0], [1], [0, 0, 1, 1], [], []>} : vector<8x8xf32>, vector<8x8xf32>, vector<8x8xf32> -> vector<8x8xf32>
    %c0_55 = arith.constant 0 : index
    %c0_56 = arith.constant 0 : index
    %c24 = arith.constant 24 : index
    %99 = vector.load %arg11[%c0_55, %c0_56, %c24] : memref<1x8x32xf32, #tpu.memory_space<vmem>>, vector<1x8x8xf32>
    %100 = vector.shape_cast %99 : vector<1x8x8xf32> to vector<8x8xf32>
    %101 = vector.shape_cast %98 : vector<8x8xf32> to vector<1x8x8xf32>
    tpu.vector_store %arg11[%c0_55, %c0_56, %c24], %101 {strides = array<i32>} : memref<1x8x32xf32, #tpu.memory_space<vmem>>, vector<1x8x8xf32>,
    %c3 = arith.constant 3 : index
    %c0_57 = arith.constant 0 : index
    %c0_58 = arith.constant 0 : index
    %c0_59 = arith.constant 0 : index
    %102 = vector.load %arg12[%c3, %c0_57, %c0_58, %c0_59] : memref<4x1x8x8xf32, #tpu.memory_space<vmem>>, vector<1x1x8x8xf32>
    %103 = vector.shape_cast %102 : vector<1x1x8x8xf32> to vector<8x8xf32>
    %104 = vector.shape_cast %97 : vector<8x8xf32> to vector<1x1x8x8xf32>
    tpu.vector_store %arg12[%c3, %c0_57, %c0_58, %c0_59], %104 {strides = array<i32>} : memref<4x1x8x8xf32, #tpu.memory_space<vmem>>, vector<1x1x8x8xf32>,
    return
  }
  func.func @transform_0(%arg0: i32, %arg1: i32) -> (i32, i32, i32) {
    %c0_i32 = arith.constant 0 : i32
    %c0_i32_0 = arith.constant 0 : i32
    return %arg0, %arg1, %c0_i32 : i32, i32, i32
  }
  func.func @transform_1(%arg0: i32, %arg1: i32) -> (i32, i32, i32) {
    %c0_i32 = arith.constant 0 : i32
    %c0_i32_0 = arith.constant 0 : i32
    %c0_i32_1 = arith.constant 0 : i32
    return %arg0, %c0_i32, %c0_i32_0 : i32, i32, i32
  }
  func.func @transform_2(%arg0: i32, %arg1: i32) -> (i32, i32, i32) {
    %c0_i32 = arith.constant 0 : i32
    %c0_i32_0 = arith.constant 0 : i32
    %c0_i32_1 = arith.constant 0 : i32
    return %arg0, %c0_i32, %c0_i32_0 : i32, i32, i32
  }
  func.func @transform_3(%arg0: i32, %arg1: i32) -> (i32, i32) {
    %c0_i32 = arith.constant 0 : i32
    %c0_i32_0 = arith.constant 0 : i32
    %c0_i32_1 = arith.constant 0 : i32
    return %c0_i32, %c0_i32_0 : i32, i32
  }
  func.func @transform_4(%arg0: i32, %arg1: i32) -> (i32, i32) {
    %c0_i32 = arith.constant 0 : i32
    %c0_i32_0 = arith.constant 0 : i32
    %c0_i32_1 = arith.constant 0 : i32
    return %c0_i32, %c0_i32_0 : i32, i32
  }
  func.func @transform_5(%arg0: i32, %arg1: i32) -> (i32, i32) {
    %c0_i32 = arith.constant 0 : i32
    %c0_i32_0 = arith.constant 0 : i32
    %c0_i32_1 = arith.constant 0 : i32
    return %c0_i32, %c0_i32_0 : i32, i32
  }
  func.func @transform_6(%arg0: i32, %arg1: i32) -> (i32, i32) {
    %c0_i32 = arith.constant 0 : i32
    %c0_i32_0 = arith.constant 0 : i32
    %c0_i32_1 = arith.constant 0 : i32
    return %c0_i32, %c0_i32_0 : i32, i32
  }
  func.func @transform_7(%arg0: i32, %arg1: i32) -> (i32, i32) {
    %c0_i32 = arith.constant 0 : i32
    %c0_i32_0 = arith.constant 0 : i32
    %c0_i32_1 = arith.constant 0 : i32
    return %c0_i32, %c0_i32_0 : i32, i32
  }
  func.func @transform_8(%arg0: i32, %arg1: i32) -> (i32, i32) {
    %c0_i32 = arith.constant 0 : i32
    %c0_i32_0 = arith.constant 0 : i32
    %c0_i32_1 = arith.constant 0 : i32
    return %c0_i32, %c0_i32_0 : i32, i32
  }
  func.func @transform_9(%arg0: i32, %arg1: i32) -> (i32, i32, i32) {
    %c0_i32 = arith.constant 0 : i32
    %c0_i32_0 = arith.constant 0 : i32
    return %arg0, %arg1, %c0_i32 : i32, i32, i32
  }
  func.func @transform_10(%arg0: i32, %arg1: i32) -> (i32, i32, i32, i32) {
    %c0_i32 = arith.constant 0 : i32
    %c0_i32_0 = arith.constant 0 : i32
    %c0_i32_1 = arith.constant 0 : i32
    return %c0_i32, %arg0, %arg1, %c0_i32_0 : i32, i32, i32, i32
  }
}

module attributes {stable_mosaic.version = 11 : i64} {
  func.func @kernel(%arg0: i32, %arg1: i32, %arg2: memref<1x8x32xf32, #tpu.memory_space<vmem>>, %arg3: memref<1x8x32xf32, #tpu.memory_space<vmem>>, %arg4: memref<1x8x32xf32, #tpu.memory_space<vmem>>, %arg5: memref<32x32xf32, #tpu.memory_space<vmem>>, %arg6: memref<32x32xf32, #tpu.memory_space<vmem>>, %arg7: memref<32x32xf32, #tpu.memory_space<vmem>>, %arg8: memref<1x32xf32, #tpu.memory_space<vmem>>, %arg9: memref<1x32xf32, #tpu.memory_space<vmem>>, %arg10: memref<1x32xf32, #tpu.memory_space<vmem>>, %arg11: memref<1x8x32xf32, #tpu.memory_space<vmem>>, %arg12: memref<4x1x8x8xf32, #tpu.memory_space<vmem>>) attributes {dimension_semantics = [#tpu.dimension_semantics<parallel>, #tpu.dimension_semantics<parallel>], iteration_bounds = array<i64: 2, 1>, scalar_prefetch = 0 : i64, scratch_operands = 0 : i64, tpu.core_type = #tpu.core_type<tc>, window_params = [{transform_indices = @transform_0, window_bounds = array<i64: 1, 8, 32>}, {transform_indices = @transform_1, window_bounds = array<i64: 1, 8, 32>}, {transform_indices = @transform_2, window_bounds = array<i64: 1, 8, 32>}, {pipeline_mode = #tpu.pipeline_mode<synchronous>, transform_indices = @transform_3, window_bounds = array<i64: 32, 32>}, {pipeline_mode = #tpu.pipeline_mode<synchronous>, transform_indices = @transform_4, window_bounds = array<i64: 32, 32>}, {pipeline_mode = #tpu.pipeline_mode<synchronous>, transform_indices = @transform_5, window_bounds = array<i64: 32, 32>}, {pipeline_mode = #tpu.pipeline_mode<synchronous>, transform_indices = @transform_6, window_bounds = array<i64: 1, 32>}, {pipeline_mode = #tpu.pipeline_mode<synchronous>, transform_indices = @transform_7, window_bounds = array<i64: 1, 32>}, {pipeline_mode = #tpu.pipeline_mode<synchronous>, transform_indices = @transform_8, window_bounds = array<i64: 1, 32>}, {transform_indices = @transform_9, window_bounds = array<i64: 1, 8, 32>}, {transform_indices = @transform_10, window_bounds = array<i64: 4, 1, 8, 8>}]} {
    %c0 = arith.constant 0 : index
    %c0_0 = arith.constant 0 : index
    %c0_1 = arith.constant 0 : index
    %0 = vector.load %arg2[%c0, %c0_0, %c0_1] : memref<1x8x32xf32, #tpu.memory_space<vmem>>, vector<1x8x32xf32>
    %1 = vector.shape_cast %0 : vector<1x8x32xf32> to vector<8x32xf32>
    %c0_2 = arith.constant 0 : index
    %c0_3 = arith.constant 0 : index
    %c0_4 = arith.constant 0 : index
    %2 = vector.load %arg3[%c0_2, %c0_3, %c0_4] : memref<1x8x32xf32, #tpu.memory_space<vmem>>, vector<1x8x32xf32>
    %3 = vector.shape_cast %2 : vector<1x8x32xf32> to vector<8x32xf32>
    %c0_5 = arith.constant 0 : index
    %c0_6 = arith.constant 0 : index
    %c0_7 = arith.constant 0 : index
    %4 = vector.load %arg4[%c0_5, %c0_6, %c0_7] : memref<1x8x32xf32, #tpu.memory_space<vmem>>, vector<1x8x32xf32>
    %5 = vector.shape_cast %4 : vector<1x8x32xf32> to vector<8x32xf32>
    %c0_8 = arith.constant 0 : index
    %c0_9 = arith.constant 0 : index
    %6 = vector.load %arg5[%c0_8, %c0_9] : memref<32x32xf32, #tpu.memory_space<vmem>>, vector<32x32xf32>
    %cst = arith.constant dense<0.000000e+00> : vector<8x32xf32>
    %7 = tpu.matmul %1, %6, %cst {dimension_numbers = #tpu.dot_dimension_numbers<[1], [0], [0], [1], [0, 0, 1, 1], [], []>} : vector<8x32xf32>, vector<32x32xf32>, vector<8x32xf32> -> vector<8x32xf32>
    %c0_10 = arith.constant 0 : index
    %c0_11 = arith.constant 0 : index
    %8 = vector.load %arg8[%c0_10, %c0_11] : memref<1x32xf32, #tpu.memory_space<vmem>>, vector<1x32xf32>
    %9 = vector.broadcast %8 : vector<1x32xf32> to vector<8x32xf32>
    %10 = arith.addf %7, %9 : vector<8x32xf32>
    %c0_12 = arith.constant 0 : index
    %c0_13 = arith.constant 0 : index
    %11 = vector.load %arg6[%c0_12, %c0_13] : memref<32x32xf32, #tpu.memory_space<vmem>>, vector<32x32xf32>
    %cst_14 = arith.constant dense<0.000000e+00> : vector<8x32xf32>
    %12 = tpu.matmul %3, %11, %cst_14 {dimension_numbers = #tpu.dot_dimension_numbers<[1], [0], [0], [1], [0, 0, 1, 1], [], []>} : vector<8x32xf32>, vector<32x32xf32>, vector<8x32xf32> -> vector<8x32xf32>
    %c0_15 = arith.constant 0 : index
    %c0_16 = arith.constant 0 : index
    %13 = vector.load %arg9[%c0_15, %c0_16] : memref<1x32xf32, #tpu.memory_space<vmem>>, vector<1x32xf32>
    %14 = vector.broadcast %13 : vector<1x32xf32> to vector<8x32xf32>
    %15 = arith.addf %12, %14 : vector<8x32xf32>
    %c0_17 = arith.constant 0 : index
    %c0_18 = arith.constant 0 : index
    %16 = vector.load %arg7[%c0_17, %c0_18] : memref<32x32xf32, #tpu.memory_space<vmem>>, vector<32x32xf32>
    %cst_19 = arith.constant dense<0.000000e+00> : vector<8x32xf32>
    %17 = tpu.matmul %5, %16, %cst_19 {dimension_numbers = #tpu.dot_dimension_numbers<[1], [0], [0], [1], [0, 0, 1, 1], [], []>} : vector<8x32xf32>, vector<32x32xf32>, vector<8x32xf32> -> vector<8x32xf32>
    %c0_20 = arith.constant 0 : index
    %c0_21 = arith.constant 0 : index
    %18 = vector.load %arg10[%c0_20, %c0_21] : memref<1x32xf32, #tpu.memory_space<vmem>>, vector<1x32xf32>
    %19 = vector.broadcast %18 : vector<1x32xf32> to vector<8x32xf32>
    %20 = arith.addf %17, %19 : vector<8x32xf32>
    %21 = vector.extract_strided_slice %10 {offsets = [0, 0], sizes = [8, 8], strides = [1, 1]} : vector<8x32xf32> to vector<8x8xf32>
    %22 = vector.extract_strided_slice %15 {offsets = [0, 0], sizes = [8, 8], strides = [1, 1]} : vector<8x32xf32> to vector<8x8xf32>
    %23 = vector.extract_strided_slice %20 {offsets = [0, 0], sizes = [8, 8], strides = [1, 1]} : vector<8x32xf32> to vector<8x8xf32>
    %cst_22 = arith.constant dense<0.000000e+00> : vector<8x8xf32>
    %24 = tpu.matmul %21, %22, %cst_22 {dimension_numbers = #tpu.dot_dimension_numbers<[1], [1], [0], [0], [0, 0, 1, 0], [], []>} : vector<8x8xf32>, vector<8x8xf32>, vector<8x8xf32> -> vector<8x8xf32>
    %cst_23 = arith.constant dense<0xFF800000> : vector<8xf32>
    %25 = vector.multi_reduction <maximumf>, %24, %cst_23 [1] : vector<8x8xf32> to vector<8xf32>
    %26 = vector.shape_cast %25 : vector<8xf32> to vector<8x1xf32>
    %27 = vector.broadcast %26 : vector<8x1xf32> to vector<8x8xf32>
    %28 = arith.subf %24, %27 : vector<8x8xf32>
    %29 = math.exp %28 : vector<8x8xf32>
    %cst_24 = arith.constant dense<0.000000e+00> : vector<8xf32>
    %30 = vector.multi_reduction <add>, %29, %cst_24 [1] : vector<8x8xf32> to vector<8xf32>
    %31 = vector.shape_cast %30 : vector<8xf32> to vector<8x1xf32>
    %32 = tpu.reciprocal %31 : vector<8x1xf32> -> vector<8x1xf32>
    %33 = vector.broadcast %32 : vector<8x1xf32> to vector<8x8xf32>
    %34 = arith.mulf %29, %33 : vector<8x8xf32>
    %cst_25 = arith.constant dense<0.000000e+00> : vector<8x8xf32>
    %35 = tpu.matmul %34, %23, %cst_25 {dimension_numbers = #tpu.dot_dimension_numbers<[1], [0], [0], [1], [0, 0, 1, 1], [], []>} : vector<8x8xf32>, vector<8x8xf32>, vector<8x8xf32> -> vector<8x8xf32>
    %c0_26 = arith.constant 0 : index
    %c0_27 = arith.constant 0 : index
    %c0_28 = arith.constant 0 : index
    %36 = vector.load %arg11[%c0_26, %c0_27, %c0_28] : memref<1x8x32xf32, #tpu.memory_space<vmem>>, vector<1x8x8xf32>
    %37 = vector.shape_cast %36 : vector<1x8x8xf32> to vector<8x8xf32>
    %38 = vector.shape_cast %35 : vector<8x8xf32> to vector<1x8x8xf32>
    tpu.vector_store %arg11[%c0_26, %c0_27, %c0_28], %38 {strides = array<i32>} : memref<1x8x32xf32, #tpu.memory_space<vmem>>, vector<1x8x8xf32>,
    %c0_29 = arith.constant 0 : index
    %c0_30 = arith.constant 0 : index
    %c0_31 = arith.constant 0 : index
    %c0_32 = arith.constant 0 : index
    %39 = vector.load %arg12[%c0_29, %c0_30, %c0_31, %c0_32] : memref<4x1x8x8xf32, #tpu.memory_space<vmem>>, vector<1x1x8x8xf32>
    %40 = vector.shape_cast %39 : vector<1x1x8x8xf32> to vector<8x8xf32>
    %41 = vector.shape_cast %34 : vector<8x8xf32> to vector<1x1x8x8xf32>
    tpu.vector_store %arg12[%c0_29, %c0_30, %c0_31, %c0_32], %41 {strides = array<i32>} : memref<4x1x8x8xf32, #tpu.memory_space<vmem>>, vector<1x1x8x8xf32>,
    %42 = vector.extract_strided_slice %10 {offsets = [0, 8], sizes = [8, 8], strides = [1, 1]} : vector<8x32xf32> to vector<8x8xf32>
    %43 = vector.extract_strided_slice %15 {offsets = [0, 8], sizes = [8, 8], strides = [1, 1]} : vector<8x32xf32> to vector<8x8xf32>
    %44 = vector.extract_strided_slice %20 {offsets = [0, 8], sizes = [8, 8], strides = [1, 1]} : vector<8x32xf32> to vector<8x8xf32>
    %cst_33 = arith.constant dense<0.000000e+00> : vector<8x8xf32>
    %45 = tpu.matmul %42, %43, %cst_33 {dimension_numbers = #tpu.dot_dimension_numbers<[1], [1], [0], [0], [0, 0, 1, 0], [], []>} : vector<8x8xf32>, vector<8x8xf32>, vector<8x8xf32> -> vector<8x8xf32>
    %cst_34 = arith.constant dense<0xFF800000> : vector<8xf32>
    %46 = vector.multi_reduction <maximumf>, %45, %cst_34 [1] : vector<8x8xf32> to vector<8xf32>
    %47 = vector.shape_cast %46 : vector<8xf32> to vector<8x1xf32>
    %48 = vector.broadcast %47 : vector<8x1xf32> to vector<8x8xf32>
    %49 = arith.subf %45, %48 : vector<8x8xf32>
    %50 = math.exp %49 : vector<8x8xf32>
    %cst_35 = arith.constant dense<0.000000e+00> : vector<8xf32>
    %51 = vector.multi_reduction <add>, %50, %cst_35 [1] : vector<8x8xf32> to vector<8xf32>
    %52 = vector.shape_cast %51 : vector<8xf32> to vector<8x1xf32>
    %53 = tpu.reciprocal %52 : vector<8x1xf32> -> vector<8x1xf32>
    %54 = vector.broadcast %53 : vector<8x1xf32> to vector<8x8xf32>
    %55 = arith.mulf %50, %54 : vector<8x8xf32>
    %cst_36 = arith.constant dense<0.000000e+00> : vector<8x8xf32>
    %56 = tpu.matmul %55, %44, %cst_36 {dimension_numbers = #tpu.dot_dimension_numbers<[1], [0], [0], [1], [0, 0, 1, 1], [], []>} : vector<8x8xf32>, vector<8x8xf32>, vector<8x8xf32> -> vector<8x8xf32>
    %c0_37 = arith.constant 0 : index
    %c0_38 = arith.constant 0 : index
    %c8 = arith.constant 8 : index
    %57 = vector.load %arg11[%c0_37, %c0_38, %c8] : memref<1x8x32xf32, #tpu.memory_space<vmem>>, vector<1x8x8xf32>
    %58 = vector.shape_cast %57 : vector<1x8x8xf32> to vector<8x8xf32>
    %59 = vector.shape_cast %56 : vector<8x8xf32> to vector<1x8x8xf32>
    tpu.vector_store %arg11[%c0_37, %c0_38, %c8], %59 {strides = array<i32>} : memref<1x8x32xf32, #tpu.memory_space<vmem>>, vector<1x8x8xf32>,
    %c1 = arith.constant 1 : index
    %c0_39 = arith.constant 0 : index
    %c0_40 = arith.constant 0 : index
    %c0_41 = arith.constant 0 : index
    %60 = vector.load %arg12[%c1, %c0_39, %c0_40, %c0_41] : memref<4x1x8x8xf32, #tpu.memory_space<vmem>>, vector<1x1x8x8xf32>
    %61 = vector.shape_cast %60 : vector<1x1x8x8xf32> to vector<8x8xf32>
    %62 = vector.shape_cast %55 : vector<8x8xf32> to vector<1x1x8x8xf32>
    tpu.vector_store %arg12[%c1, %c0_39, %c0_40, %c0_41], %62 {strides = array<i32>} : memref<4x1x8x8xf32, #tpu.memory_space<vmem>>, vector<1x1x8x8xf32>,
    %63 = vector.extract_strided_slice %10 {offsets = [0, 16], sizes = [8, 8], strides = [1, 1]} : vector<8x32xf32> to vector<8x8xf32>
    %64 = vector.extract_strided_slice %15 {offsets = [0, 16], sizes = [8, 8], strides = [1, 1]} : vector<8x32xf32> to vector<8x8xf32>
    %65 = vector.extract_strided_slice %20 {offsets = [0, 16], sizes = [8, 8], strides = [1, 1]} : vector<8x32xf32> to vector<8x8xf32>
    %cst_42 = arith.constant dense<0.000000e+00> : vector<8x8xf32>
    %66 = tpu.matmul %63, %64, %cst_42 {dimension_numbers = #tpu.dot_dimension_numbers<[1], [1], [0], [0], [0, 0, 1, 0], [], []>} : vector<8x8xf32>, vector<8x8xf32>, vector<8x8xf32> -> vector<8x8xf32>
    %cst_43 = arith.constant dense<0xFF800000> : vector<8xf32>
    %67 = vector.multi_reduction <maximumf>, %66, %cst_43 [1] : vector<8x8xf32> to vector<8xf32>
    %68 = vector.shape_cast %67 : vector<8xf32> to vector<8x1xf32>
    %69 = vector.broadcast %68 : vector<8x1xf32> to vector<8x8xf32>
    %70 = arith.subf %66, %69 : vector<8x8xf32>
    %71 = math.exp %70 : vector<8x8xf32>
    %cst_44 = arith.constant dense<0.000000e+00> : vector<8xf32>
    %72 = vector.multi_reduction <add>, %71, %cst_44 [1] : vector<8x8xf32> to vector<8xf32>
    %73 = vector.shape_cast %72 : vector<8xf32> to vector<8x1xf32>
    %74 = tpu.reciprocal %73 : vector<8x1xf32> -> vector<8x1xf32>
    %75 = vector.broadcast %74 : vector<8x1xf32> to vector<8x8xf32>
    %76 = arith.mulf %71, %75 : vector<8x8xf32>
    %cst_45 = arith.constant dense<0.000000e+00> : vector<8x8xf32>
    %77 = tpu.matmul %76, %65, %cst_45 {dimension_numbers = #tpu.dot_dimension_numbers<[1], [0], [0], [1], [0, 0, 1, 1], [], []>} : vector<8x8xf32>, vector<8x8xf32>, vector<8x8xf32> -> vector<8x8xf32>
    %c0_46 = arith.constant 0 : index
    %c0_47 = arith.constant 0 : index
    %c16 = arith.constant 16 : index
    %78 = vector.load %arg11[%c0_46, %c0_47, %c16] : memref<1x8x32xf32, #tpu.memory_space<vmem>>, vector<1x8x8xf32>
    %79 = vector.shape_cast %78 : vector<1x8x8xf32> to vector<8x8xf32>
    %80 = vector.shape_cast %77 : vector<8x8xf32> to vector<1x8x8xf32>
    tpu.vector_store %arg11[%c0_46, %c0_47, %c16], %80 {strides = array<i32>} : memref<1x8x32xf32, #tpu.memory_space<vmem>>, vector<1x8x8xf32>,
    %c2 = arith.constant 2 : index
    %c0_48 = arith.constant 0 : index
    %c0_49 = arith.constant 0 : index
    %c0_50 = arith.constant 0 : index
    %81 = vector.load %arg12[%c2, %c0_48, %c0_49, %c0_50] : memref<4x1x8x8xf32, #tpu.memory_space<vmem>>, vector<1x1x8x8xf32>
    %82 = vector.shape_cast %81 : vector<1x1x8x8xf32> to vector<8x8xf32>
    %83 = vector.shape_cast %76 : vector<8x8xf32> to vector<1x1x8x8xf32>
    tpu.vector_store %arg12[%c2, %c0_48, %c0_49, %c0_50], %83 {strides = array<i32>} : memref<4x1x8x8xf32, #tpu.memory_space<vmem>>, vector<1x1x8x8xf32>,
    %84 = vector.extract_strided_slice %10 {offsets = [0, 24], sizes = [8, 8], strides = [1, 1]} : vector<8x32xf32> to vector<8x8xf32>
    %85 = vector.extract_strided_slice %15 {offsets = [0, 24], sizes = [8, 8], strides = [1, 1]} : vector<8x32xf32> to vector<8x8xf32>
    %86 = vector.extract_strided_slice %20 {offsets = [0, 24], sizes = [8, 8], strides = [1, 1]} : vector<8x32xf32> to vector<8x8xf32>
    %cst_51 = arith.constant dense<0.000000e+00> : vector<8x8xf32>
    %87 = tpu.matmul %84, %85, %cst_51 {dimension_numbers = #tpu.dot_dimension_numbers<[1], [1], [0], [0], [0, 0, 1, 0], [], []>} : vector<8x8xf32>, vector<8x8xf32>, vector<8x8xf32> -> vector<8x8xf32>
    %cst_52 = arith.constant dense<0xFF800000> : vector<8xf32>
    %88 = vector.multi_reduction <maximumf>, %87, %cst_52 [1] : vector<8x8xf32> to vector<8xf32>
    %89 = vector.shape_cast %88 : vector<8xf32> to vector<8x1xf32>
    %90 = vector.broadcast %89 : vector<8x1xf32> to vector<8x8xf32>
    %91 = arith.subf %87, %90 : vector<8x8xf32>
    %92 = math.exp %91 : vector<8x8xf32>
    %cst_53 = arith.constant dense<0.000000e+00> : vector<8xf32>
    %93 = vector.multi_reduction <add>, %92, %cst_53 [1] : vector<8x8xf32> to vector<8xf32>
    %94 = vector.shape_cast %93 : vector<8xf32> to vector<8x1xf32>
    %95 = tpu.reciprocal %94 : vector<8x1xf32> -> vector<8x1xf32>
    %96 = vector.broadcast %95 : vector<8x1xf32> to vector<8x8xf32>
    %97 = arith.mulf %92, %96 : vector<8x8xf32>
    %cst_54 = arith.constant dense<0.000000e+00> : vector<8x8xf32>
    %98 = tpu.matmul %97, %86, %cst_54 {dimension_numbers = #tpu.dot_dimension_numbers<[1], [0], [0], [1], [0, 0, 1, 1], [], []>} : vector<8x8xf32>, vector<8x8xf32>, vector<8x8xf32> -> vector<8x8xf32>
    %c0_55 = arith.constant 0 : index
    %c0_56 = arith.constant 0 : index
    %c24 = arith.constant 24 : index
    %99 = vector.load %arg11[%c0_55, %c0_56, %c24] : memref<1x8x32xf32, #tpu.memory_space<vmem>>, vector<1x8x8xf32>
    %100 = vector.shape_cast %99 : vector<1x8x8xf32> to vector<8x8xf32>
    %101 = vector.shape_cast %98 : vector<8x8xf32> to vector<1x8x8xf32>
    tpu.vector_store %arg11[%c0_55, %c0_56, %c24], %101 {strides = array<i32>} : memref<1x8x32xf32, #tpu.memory_space<vmem>>, vector<1x8x8xf32>,
    %c3 = arith.constant 3 : index
    %c0_57 = arith.constant 0 : index
    %c0_58 = arith.constant 0 : index
    %c0_59 = arith.constant 0 : index
    %102 = vector.load %arg12[%c3, %c0_57, %c0_58, %c0_59] : memref<4x1x8x8xf32, #tpu.memory_space<vmem>>, vector<1x1x8x8xf32>
    %103 = vector.shape_cast %102 : vector<1x1x8x8xf32> to vector<8x8xf32>
    %104 = vector.shape_cast %97 : vector<8x8xf32> to vector<1x1x8x8xf32>
    tpu.vector_store %arg12[%c3, %c0_57, %c0_58, %c0_59], %104 {strides = array<i32>} : memref<4x1x8x8xf32, #tpu.memory_space<vmem>>, vector<1x1x8x8xf32>,
    return
  }
  func.func @transform_0(%arg0: i32, %arg1: i32) -> (i32, i32, i32) {
    %c0_i32 = arith.constant 0 : i32
    %c0_i32_0 = arith.constant 0 : i32
    return %arg0, %arg1, %c0_i32 : i32, i32, i32
  }
  func.func @transform_1(%arg0: i32, %arg1: i32) -> (i32, i32, i32) {
    %c0_i32 = arith.constant 0 : i32
    %c0_i32_0 = arith.constant 0 : i32
    %c0_i32_1 = arith.constant 0 : i32
    return %arg0, %c0_i32, %c0_i32_0 : i32, i32, i32
  }
  func.func @transform_2(%arg0: i32, %arg1: i32) -> (i32, i32, i32) {
    %c0_i32 = arith.constant 0 : i32
    %c0_i32_0 = arith.constant 0 : i32
    %c0_i32_1 = arith.constant 0 : i32
    return %arg0, %c0_i32, %c0_i32_0 : i32, i32, i32
  }
  func.func @transform_3(%arg0: i32, %arg1: i32) -> (i32, i32) {
    %c0_i32 = arith.constant 0 : i32
    %c0_i32_0 = arith.constant 0 : i32
    %c0_i32_1 = arith.constant 0 : i32
    return %c0_i32, %c0_i32_0 : i32, i32
  }
  func.func @transform_4(%arg0: i32, %arg1: i32) -> (i32, i32) {
    %c0_i32 = arith.constant 0 : i32
    %c0_i32_0 = arith.constant 0 : i32
    %c0_i32_1 = arith.constant 0 : i32
    return %c0_i32, %c0_i32_0 : i32, i32
  }
  func.func @transform_5(%arg0: i32, %arg1: i32) -> (i32, i32) {
    %c0_i32 = arith.constant 0 : i32
    %c0_i32_0 = arith.constant 0 : i32
    %c0_i32_1 = arith.constant 0 : i32
    return %c0_i32, %c0_i32_0 : i32, i32
  }
  func.func @transform_6(%arg0: i32, %arg1: i32) -> (i32, i32) {
    %c0_i32 = arith.constant 0 : i32
    %c0_i32_0 = arith.constant 0 : i32
    %c0_i32_1 = arith.constant 0 : i32
    return %c0_i32, %c0_i32_0 : i32, i32
  }
  func.func @transform_7(%arg0: i32, %arg1: i32) -> (i32, i32) {
    %c0_i32 = arith.constant 0 : i32
    %c0_i32_0 = arith.constant 0 : i32
    %c0_i32_1 = arith.constant 0 : i32
    return %c0_i32, %c0_i32_0 : i32, i32
  }
  func.func @transform_8(%arg0: i32, %arg1: i32) -> (i32, i32) {
    %c0_i32 = arith.constant 0 : i32
    %c0_i32_0 = arith.constant 0 : i32
    %c0_i32_1 = arith.constant 0 : i32
    return %c0_i32, %c0_i32_0 : i32, i32
  }
  func.func @transform_9(%arg0: i32, %arg1: i32) -> (i32, i32, i32) {
    %c0_i32 = arith.constant 0 : i32
    %c0_i32_0 = arith.constant 0 : i32
    return %arg0, %arg1, %c0_i32 : i32, i32, i32
  }
  func.func @transform_10(%arg0: i32, %arg1: i32) -> (i32, i32, i32, i32) {
    %c0_i32 = arith.constant 0 : i32
    %c0_i32_0 = arith.constant 0 : i32
    %c0_i32_1 = arith.constant 0 : i32
    return %c0_i32, %arg0, %arg1, %c0_i32_0 : i32, i32, i32, i32
  }
}

</mosaic_0001>

<llo_original>
// kernel: tpu_custom_call.1
$region0: #{tpu_custom_call.1}
  #allocation0 [shape = 'u32[]', space=smem, size = 0x4, offset = 0x4, fixed_abs, tag = 'smem constant byte address 0x4 - core index']
  #allocation1 [shape = 'u32[72,128]{1,0:T(1,128)}', space=vmem, size = 0x9000, scoped, tag = 'internal scratch']
  %s0 = inlined_call_operand.hbm [shape: f32[2,8,32], index: 0, kind: input, shape index: {}]
  %s1 = inlined_call_operand.hbm [shape: f32[2,8,32], index: 1, kind: input, shape index: {}]
  %s2 = inlined_call_operand.hbm [shape: f32[2,8,32], index: 2, kind: input, shape index: {}]
  %s3 = inlined_call_operand.hbm [shape: f32[32,32], index: 3, kind: input, shape index: {}]
  %s4 = inlined_call_operand.hbm [shape: f32[32,32], index: 4, kind: input, shape index: {}]
  %s5 = inlined_call_operand.hbm [shape: f32[32,32], index: 5, kind: input, shape index: {}]
  %s6 = inlined_call_operand.vmem [shape: f32[1,32], index: 6, kind: input, shape index: {}]
  %s7 = inlined_call_operand.vmem [shape: f32[1,32], index: 7, kind: input, shape index: {}]
  %s8 = inlined_call_operand.vmem [shape: f32[1,32], index: 8, kind: input, shape index: {}]
  %s9 = inlined_call_operand.hbm [shape: f32[2,8,32], index: 9, kind: output, shape index: {0}]
  %s10 = inlined_call_operand.hbm [shape: f32[4,2,8,8], index: 10, kind: output, shape index: {1}]
  %11 = xla_tuple %s9, %s10
  %s12 = sld [smem:[#allocation0]]
  $region101: #{tpu_custom_call.1} parent=0
    _
  %s14 = ssub.s32 1, %s12
  %s15 = scalar_select 0, %s14, %s12
  $region1: #{tpu_custom_call.1} parent=0
    #allocation2 [shape = 'u8[8192]{0}', space=vmem, size = 0x2000, scoped, tag = 'input window, operand 0']
    #allocation3 [shape = 's32[2]{0}', space=sflag, size = 0x8, scoped, tag = 'scoped memory for tpu_custom_call.1']
    #allocation4 [shape = 's32[2]{0}', space=sflag, size = 0x8, scoped, tag = 'scoped memory for tpu_custom_call.1']
    #allocation5 [shape = 'u8[8192]{0}', space=vmem, size = 0x2000, scoped, tag = 'input window, operand 1']
    #allocation6 [shape = 's32[2]{0}', space=sflag, size = 0x8, scoped, tag = 'scoped memory for tpu_custom_call.1']
    #allocation7 [shape = 'u8[8192]{0}', space=vmem, size = 0x2000, scoped, tag = 'input window, operand 2']
    #allocation8 [shape = 'u8[16384]{0}', space=vmem, size = 0x4000, scoped, tag = 'input window, operand 3, single buffered']
    #allocation9 [shape = 's32[1]{0}', space=sflag, size = 0x4, scoped, tag = 'scoped memory for tpu_custom_call.1']
    #allocation10 [shape = 'u8[16384]{0}', space=vmem, size = 0x4000, scoped, tag = 'input window, operand 4, single buffered']
    #allocation11 [shape = 'u8[16384]{0}', space=vmem, size = 0x4000, scoped, tag = 'input window, operand 5, single buffered']
    #allocation12 [shape = 's32[1]{0}', space=sflag, size = 0x4, scoped, tag = 'scoped memory for tpu_custom_call.1']
    #allocation13 [shape = 'u8[8192]{0}', space=vmem, size = 0x2000, scoped, tag = 'output window, operand 0']
    #allocation14 [shape = 'u8[32768]{0}', space=vmem, size = 0x8000, scoped, tag = 'output window, operand 1']
    #allocation15 [shape = 's32[2]{0}', space=sflag, size = 0x8, scoped, tag = 'scoped memory for tpu_custom_call.1']
    %16 = vsyncpa [#allocation3], 0
    %s17 = scalar_lea.sflag [#allocation3], 1
    %18 = vsyncpa %s17, 0
    %19 = vsyncpa [#allocation6], 0
    %s20 = scalar_lea.sflag [#allocation6], 1
    %21 = vsyncpa %s20, 0
    %22 = vsyncpa [#allocation9], 0
    %23 = vsyncpa [#allocation12], 0
    %24 = vsyncpa [#allocation4], 0
    %s25 = scalar_lea.sflag [#allocation4], 1
    %26 = vsyncpa %s25, 0
    %27 = vsyncpa [#allocation15], 0
    %s28 = scalar_lea.sflag [#allocation15], 1
    %29 = vsyncpa %s28, 0
    loop: start=0, step=1, limit=4
    $region2: #{tpu_custom_call.1} parent=1 // loop_pre_header
      _
    $region3: #{tpu_custom_call.1} parent=1 // loop_header
      %s31 = sphi 0, %s35
      %p32 = scmp.ge.s32.totalorder %s31, 4
      %s38 = sphi 0, %s50
      %s39 = sphi 0, %s46
      %s40 = sphi 0, %s38
      %s41 = sphi 0, %s39
      %s42 = sphi 0, %s40
      %s43 = sphi 0, %s41
      %s55 = sphi 0, %s57
      %s58 = sphi 0, %s55
      %s59 = sphi 0, %s58
      %s75 = sphi 0, %s59
      %s81 = sphi 0, %s83
      %s84 = sphi 0, %s81
      %s85 = sphi 0, %s84
      %s101 = sphi 0, %s85
      %s107 = sphi 0, %s109
      %s110 = sphi 0, %s107
      %s111 = sphi 0, %s110
      %s127 = sphi 0, %s111
      %s131 = sphi 0, %s131
      %s133 = sphi 0, %s131
      %s134 = sphi 0, %s133
      %s148 = sphi 0, %s134
      %s152 = sphi 0, %s152
      %s154 = sphi 0, %s152
      %s155 = sphi 0, %s154
      %s169 = sphi 0, %s155
      %s173 = sphi 0, %s173
      %s175 = sphi 0, %s173
      %s176 = sphi 0, %s175
      %s190 = sphi 0, %s176
      %s194 = sphi 0, %s194
      %s196 = sphi 0, %s194
      %s197 = sphi 0, %s196
      %s211 = sphi 0, %s197
      %s215 = sphi 0, %s215
      %s217 = sphi 0, %s215
      %s218 = sphi 0, %s217
      %s232 = sphi 0, %s218
      %s236 = sphi 0, %s236
      %s238 = sphi 0, %s236
      %s239 = sphi 0, %s238
      %s253 = sphi 0, %s239
      %s261 = sphi 0, %s263
      %s264 = sphi 0, %s261
      %s265 = sphi 0, %s264
      %s281 = sphi 0, %s265
      %s289 = sphi 0, %s291
      %s292 = sphi 0, %s289
      %s293 = sphi 0, %s292
      %s309 = sphi 0, %s293
    $region4: #{tpu_custom_call.1} parent=1 // loop_header_branch
      %34 = sbr.rel (%p32) target = $region8
    $region5: #{tpu_custom_call.1} parent=1 // loop_body
      %s36 = ssub.s32 %s31, 1
      %s37 = ssub.s32 %s31, 2
      %s44 = sadd.s32 1, %s39
      %p45 = scmp.ge.s32.totalorder %s44, 1
      %s46 = scalar_select %p45, 0, %s44
      %s47 = sadd.s32 1, %s38
      %s48 = scalar_select %p45, %s47, %s38
      %p49 = scmp.ge.s32.totalorder %s48, 2
      %s50 = scalar_select %p49, 0, %s48
      %s51 = ssub.s32 %s38, %s50
      %s52 = ssub.s32 %s39, %s46
      %s53 = sor.u32 %s51, %s52
      %p54 = scmp.eq.s32.totalorder %s53, 0
      %s56 = sadd.s32 %s55, 1
      %s57 = scalar_select %p54, %s55, %s56
      %p60 = pneg %p54
      %p61 = scmp.eq.s32.totalorder %s31, 1
      %p62 = por %p60, %p61
      %p63 = scmp.ne.s32.totalorder %s55, %s58
      %p64 = scmp.eq.s32.totalorder %s31, 0
      %p65 = por %p63, %p64
      %p66 = scmp.ne.s32.totalorder %s55, %s58
      %p67 = scmp.eq.s32.totalorder %s36, 1
      %p68 = por %p66, %p67
      %p69 = scmp.ne.s32.totalorder %s58, %s59
      %p70 = scmp.eq.s32.totalorder %s36, 0
      %p71 = por %p69, %p70
      %p72 = scmp.ne.s32.totalorder %s58, %s59
      %p73 = scmp.eq.s32.totalorder %s37, 1
      %p74 = por %p72, %p73
      %p76 = scmp.ne.s32.totalorder %s59, %s75
      %p77 = scmp.eq.s32.totalorder %s37, 0
      %p78 = por %p76, %p77
      %s79 = ssub.s32 %s38, %s50
      %p80 = scmp.eq.s32.totalorder %s79, 0
      %s82 = sadd.s32 %s81, 1
      %s83 = scalar_select %p80, %s81, %s82
      %p86 = pneg %p80
      %p87 = scmp.eq.s32.totalorder %s31, 1
      %p88 = por %p86, %p87
      %p89 = scmp.ne.s32.totalorder %s81, %s84
      %p90 = scmp.eq.s32.totalorder %s31, 0
      %p91 = por %p89, %p90
      %p92 = scmp.ne.s32.totalorder %s81, %s84
      %p93 = scmp.eq.s32.totalorder %s36, 1
      %p94 = por %p92, %p93
      %p95 = scmp.ne.s32.totalorder %s84, %s85
      %p96 = scmp.eq.s32.totalorder %s36, 0
      %p97 = por %p95, %p96
      %p98 = scmp.ne.s32.totalorder %s84, %s85
      %p99 = scmp.eq.s32.totalorder %s37, 1
      %p100 = por %p98, %p99
      %p102 = scmp.ne.s32.totalorder %s85, %s101
      %p103 = scmp.eq.s32.totalorder %s37, 0
      %p104 = por %p102, %p103
      %s105 = ssub.s32 %s38, %s50
      %p106 = scmp.eq.s32.totalorder %s105, 0
      %s108 = sadd.s32 %s107, 1
      %s109 = scalar_select %p106, %s107, %s108
      %p112 = pneg %p106
      %p113 = scmp.eq.s32.totalorder %s31, 1
      %p114 = por %p112, %p113
      %p115 = scmp.ne.s32.totalorder %s107, %s110
      %p116 = scmp.eq.s32.totalorder %s31, 0
      %p117 = por %p115, %p116
      %p118 = scmp.ne.s32.totalorder %s107, %s110
      %p119 = scmp.eq.s32.totalorder %s36, 1
      %p120 = por %p118, %p119
      %p121 = scmp.ne.s32.totalorder %s110, %s111
      %p122 = scmp.eq.s32.totalorder %s36, 0
      %p123 = por %p121, %p122
      %p124 = scmp.ne.s32.totalorder %s110, %s111
      %p125 = scmp.eq.s32.totalorder %s37, 1
      %p126 = por %p124, %p125
      %p128 = scmp.ne.s32.totalorder %s111, %s127
      %p129 = scmp.eq.s32.totalorder %s37, 0
      %p130 = por %p128, %p129
      %s132 = sadd.s32 %s131, 1
      %p135 = scmp.eq.s32.totalorder %s31, 1
      %p136 = scmp.ne.s32.totalorder %s131, %s133
      %p137 = scmp.eq.s32.totalorder %s31, 0
      %p138 = por %p136, %p137
      %p139 = scmp.ne.s32.totalorder %s131, %s133
      %p140 = scmp.eq.s32.totalorder %s36, 1
      %p141 = por %p139, %p140
      %p142 = scmp.ne.s32.totalorder %s133, %s134
      %p143 = scmp.eq.s32.totalorder %s36, 0
      %p144 = por %p142, %p143
      %p145 = scmp.ne.s32.totalorder %s133, %s134
      %p146 = scmp.eq.s32.totalorder %s37, 1
      %p147 = por %p145, %p146
      %p149 = scmp.ne.s32.totalorder %s134, %s148
      %p150 = scmp.eq.s32.totalorder %s37, 0
      %p151 = por %p149, %p150
      %s153 = sadd.s32 %s152, 1
      %p156 = scmp.eq.s32.totalorder %s31, 1
      %p157 = scmp.ne.s32.totalorder %s152, %s154
      %p158 = scmp.eq.s32.totalorder %s31, 0
      %p159 = por %p157, %p158
      %p160 = scmp.ne.s32.totalorder %s152, %s154
      %p161 = scmp.eq.s32.totalorder %s36, 1
      %p162 = por %p160, %p161
      %p163 = scmp.ne.s32.totalorder %s154, %s155
      %p164 = scmp.eq.s32.totalorder %s36, 0
      %p165 = por %p163, %p164
      %p166 = scmp.ne.s32.totalorder %s154, %s155
      %p167 = scmp.eq.s32.totalorder %s37, 1
      %p168 = por %p166, %p167
      %p170 = scmp.ne.s32.totalorder %s155, %s169
      %p171 = scmp.eq.s32.totalorder %s37, 0
      %p172 = por %p170, %p171
      %s174 = sadd.s32 %s173, 1
      %p177 = scmp.eq.s32.totalorder %s31, 1
      %p178 = scmp.ne.s32.totalorder %s173, %s175
      %p179 = scmp.eq.s32.totalorder %s31, 0
      %p180 = por %p178, %p179
      %p181 = scmp.ne.s32.totalorder %s173, %s175
      %p182 = scmp.eq.s32.totalorder %s36, 1
      %p183 = por %p181, %p182
      %p184 = scmp.ne.s32.totalorder %s175, %s176
      %p185 = scmp.eq.s32.totalorder %s36, 0
      %p186 = por %p184, %p185
      %p187 = scmp.ne.s32.totalorder %s175, %s176
      %p188 = scmp.eq.s32.totalorder %s37, 1
      %p189 = por %p187, %p188
      %p191 = scmp.ne.s32.totalorder %s176, %s190
      %p192 = scmp.eq.s32.totalorder %s37, 0
      %p193 = por %p191, %p192
      %s195 = sadd.s32 %s194, 1
      %p198 = scmp.eq.s32.totalorder %s31, 1
      %p199 = scmp.ne.s32.totalorder %s194, %s196
      %p200 = scmp.eq.s32.totalorder %s31, 0
      %p201 = por %p199, %p200
      %p202 = scmp.ne.s32.totalorder %s194, %s196
      %p203 = scmp.eq.s32.totalorder %s36, 1
      %p204 = por %p202, %p203
      %p205 = scmp.ne.s32.totalorder %s196, %s197
      %p206 = scmp.eq.s32.totalorder %s36, 0
      %p207 = por %p205, %p206
      %p208 = scmp.ne.s32.totalorder %s196, %s197
      %p209 = scmp.eq.s32.totalorder %s37, 1
      %p210 = por %p208, %p209
      %p212 = scmp.ne.s32.totalorder %s197, %s211
      %p213 = scmp.eq.s32.totalorder %s37, 0
      %p214 = por %p212, %p213
      %s216 = sadd.s32 %s215, 1
      %p219 = scmp.eq.s32.totalorder %s31, 1
      %p220 = scmp.ne.s32.totalorder %s215, %s217
      %p221 = scmp.eq.s32.totalorder %s31, 0
      %p222 = por %p220, %p221
      %p223 = scmp.ne.s32.totalorder %s215, %s217
      %p224 = scmp.eq.s32.totalorder %s36, 1
      %p225 = por %p223, %p224
      %p226 = scmp.ne.s32.totalorder %s217, %s218
      %p227 = scmp.eq.s32.totalorder %s36, 0
      %p228 = por %p226, %p227
      %p229 = scmp.ne.s32.totalorder %s217, %s218
      %p230 = scmp.eq.s32.totalorder %s37, 1
      %p231 = por %p229, %p230
      %p233 = scmp.ne.s32.totalorder %s218, %s232
      %p234 = scmp.eq.s32.totalorder %s37, 0
      %p235 = por %p233, %p234
      %s237 = sadd.s32 %s236, 1
      %p240 = scmp.eq.s32.totalorder %s31, 1
      %p241 = scmp.ne.s32.totalorder %s236, %s238
      %p242 = scmp.eq.s32.totalorder %s31, 0
      %p243 = por %p241, %p242
      %p244 = scmp.ne.s32.totalorder %s236, %s238
      %p245 = scmp.eq.s32.totalorder %s36, 1
      %p246 = por %p244, %p245
      %p247 = scmp.ne.s32.totalorder %s238, %s239
      %p248 = scmp.eq.s32.totalorder %s36, 0
      %p249 = por %p247, %p248
      %p250 = scmp.ne.s32.totalorder %s238, %s239
      %p251 = scmp.eq.s32.totalorder %s37, 1
      %p252 = por %p250, %p251
      %p254 = scmp.ne.s32.totalorder %s239, %s253
      %p255 = scmp.eq.s32.totalorder %s37, 0
      %p256 = por %p254, %p255
      %s257 = ssub.s32 %s38, %s50
      %s258 = ssub.s32 %s39, %s46
      %s259 = sor.u32 %s257, %s258
      %p260 = scmp.eq.s32.totalorder %s259, 0
      %s262 = sadd.s32 %s261, 1
      %s263 = scalar_select %p260, %s261, %s262
      %p266 = pneg %p260
      %p267 = scmp.eq.s32.totalorder %s31, 1
      %p268 = por %p266, %p267
      %p269 = scmp.ne.s32.totalorder %s261, %s264
      %p270 = scmp.eq.s32.totalorder %s31, 0
      %p271 = por %p269, %p270
      %p272 = scmp.ne.s32.totalorder %s261, %s264
      %p273 = scmp.eq.s32.totalorder %s36, 1
      %p274 = por %p272, %p273
      %p275 = scmp.ne.s32.totalorder %s264, %s265
      %p276 = scmp.eq.s32.totalorder %s36, 0
      %p277 = por %p275, %p276
      %p278 = scmp.ne.s32.totalorder %s264, %s265
      %p279 = scmp.eq.s32.totalorder %s37, 1
      %p280 = por %p278, %p279
      %p282 = scmp.ne.s32.totalorder %s265, %s281
      %p283 = scmp.eq.s32.totalorder %s37, 0
      %p284 = por %p282, %p283
      %s285 = ssub.s32 %s38, %s50
      %s286 = ssub.s32 %s39, %s46
      %s287 = sor.u32 %s285, %s286
      %p288 = scmp.eq.s32.totalorder %s287, 0
      %s290 = sadd.s32 %s289, 1
      %s291 = scalar_select %p288, %s289, %s290
      %p294 = pneg %p288
      %p295 = scmp.eq.s32.totalorder %s31, 1
      %p296 = por %p294, %p295
      %p297 = scmp.ne.s32.totalorder %s289, %s292
      %p298 = scmp.eq.s32.totalorder %s31, 0
      %p299 = por %p297, %p298
      %p300 = scmp.ne.s32.totalorder %s289, %s292
      %p301 = scmp.eq.s32.totalorder %s36, 1
      %p302 = por %p300, %p301
      %p303 = scmp.ne.s32.totalorder %s292, %s293
      %p304 = scmp.eq.s32.totalorder %s36, 0
      %p305 = por %p303, %p304
      %p306 = scmp.ne.s32.totalorder %s292, %s293
      %p307 = scmp.eq.s32.totalorder %s37, 1
      %p308 = por %p306, %p307
      %p310 = scmp.ne.s32.totalorder %s293, %s309
      %p311 = scmp.eq.s32.totalorder %s37, 0
      %p312 = por %p310, %p311
      %p313 = scmp.le.s32.totalorder 1, %s31
      %p314 = scmp.lt.s32.totalorder %s31, 3
      %p315 = pnand %p313, %p314
      %p316 = pneg %p315
      // Predicated region
      $region9: #{tpu_custom_call.1} parent=5 // pred_check
        _
      $region10: #{tpu_custom_call.1} parent=5 // pred_check_branch
        %318 = sbr.rel (%p315) target = $region12
      $region11: #{tpu_custom_call.1} parent=5 // pred_region
        %s319 = ssub.s32 %s31, 1
        // Predicated region
        $region13: #{tpu_custom_call.1} parent=11 // pred_check
          %p320 = pneg %p144
        $region14: #{tpu_custom_call.1} parent=11 // pred_check_branch
          %322 = sbr.rel (%p320) target = $region16
        $region15: #{tpu_custom_call.1} parent=11 // pred_region
          %324 = vsyncadd [#allocation9], 0
          %s325 = sshll.u32 %s3, 4
          %s326 = int_to_ptr.hbm [resolvable:$true] %s325
          %s327 = sshll.u32 [#allocation8], 4
          %s328 = int_to_ptr.vmem [resolvable:$true] %s327
          %333 = dma.hbm_to_vmem [thread:$0]  %s326, 512, %s328, [#allocation9], 128, 128, 8
        $region16: #{tpu_custom_call.1} parent=11 // pred_fallthru
          _
        // Predicated region
        $region17: #{tpu_custom_call.1} parent=11 // pred_check
          %p334 = pneg %p165
        $region18: #{tpu_custom_call.1} parent=11 // pred_check_branch
          %336 = sbr.rel (%p334) target = $region20
        $region19: #{tpu_custom_call.1} parent=11 // pred_region
          %338 = vsyncadd [#allocation9], 0
          %s339 = sshll.u32 %s4, 4
          %s340 = int_to_ptr.hbm [resolvable:$true] %s339
          %s341 = sshll.u32 [#allocation10], 4
          %s342 = int_to_ptr.vmem [resolvable:$true] %s341
          %347 = dma.hbm_to_vmem [thread:$0]  %s340, 512, %s342, [#allocation9], 128, 128, 8
        $region20: #{tpu_custom_call.1} parent=11 // pred_fallthru
          _
        // Predicated region
        $region21: #{tpu_custom_call.1} parent=11 // pred_check
          %p348 = pneg %p186
        $region22: #{tpu_custom_call.1} parent=11 // pred_check_branch
          %350 = sbr.rel (%p348) target = $region24
        $region23: #{tpu_custom_call.1} parent=11 // pred_region
          %352 = vsyncadd [#allocation12], 0
          %s353 = sshll.u32 %s5, 4
          %s354 = int_to_ptr.hbm [resolvable:$true] %s353
          %s355 = sshll.u32 [#allocation11], 4
          %s356 = int_to_ptr.vmem [resolvable:$true] %s355
          %361 = dma.hbm_to_vmem [thread:$0]  %s354, 512, %s356, [#allocation12], 128, 128, 8
        $region24: #{tpu_custom_call.1} parent=11 // pred_fallthru
          _
        // Predicated region
        $region25: #{tpu_custom_call.1} parent=11 // pred_check
          %p362 = pneg %p207
        $region26: #{tpu_custom_call.1} parent=11 // pred_check_branch
          %364 = sbr.rel (%p362) target = $region28
        $region27: #{tpu_custom_call.1} parent=11 // pred_region
          _
        $region28: #{tpu_custom_call.1} parent=11 // pred_fallthru
          _
        // Predicated region
        $region29: #{tpu_custom_call.1} parent=11 // pred_check
          %p365 = pneg %p228
        $region30: #{tpu_custom_call.1} parent=11 // pred_check_branch
          %367 = sbr.rel (%p365) target = $region32
        $region31: #{tpu_custom_call.1} parent=11 // pred_region
          _
        $region32: #{tpu_custom_call.1} parent=11 // pred_fallthru
          _
        // Predicated region
        $region33: #{tpu_custom_call.1} parent=11 // pred_check
          %p368 = pneg %p249
        $region34: #{tpu_custom_call.1} parent=11 // pred_check_branch
          %370 = sbr.rel (%p368) target = $region36
        $region35: #{tpu_custom_call.1} parent=11 // pred_region
          _
        $region36: #{tpu_custom_call.1} parent=11 // pred_fallthru
          _
      $region12: #{tpu_custom_call.1} parent=5 // pred_fallthru
        _
      %p371 = scmp.lt.s32.totalorder %s31, 2
      // Predicated region
      $region37: #{tpu_custom_call.1} parent=5 // pred_check
        %p372 = pneg %p371
      $region38: #{tpu_custom_call.1} parent=5 // pred_check_branch
        %374 = sbr.rel (%p372) target = $region40
      $region39: #{tpu_custom_call.1} parent=5 // pred_region
        // Predicated region
        $region41: #{tpu_custom_call.1} parent=39 // pred_check
          %p375 = pneg %p65
        $region42: #{tpu_custom_call.1} parent=39 // pred_check_branch
          %377 = sbr.rel (%p375) target = $region44
        $region43: #{tpu_custom_call.1} parent=39 // pred_region
          %s378 = sand.u32 %s55, 1
          %s379 = scalar_lea.sflag [#allocation3], %s378
          %s380 = sand.u32 %s55, 1
          %s381 = smul.addr %s380, 8
          %s382 = scalar_lea.vmem [#allocation2], %s381
          %384 = vsyncadd %s379, 0
          %s385 = sadd.s32 %s39, %s38
          %s386 = smul.addr %s385, 8
          %s387 = scalar_lea.hbm %s0, %s386
          %s389 = sshll.u32 %s387, 4
          %s390 = int_to_ptr.hbm [resolvable:$true] %s389
          %s391 = sshll.u32 %s382, 4
          %s392 = int_to_ptr.vmem [resolvable:$true] %s391
          %394 = dma.hbm_to_vmem [thread:$0]  %s390, 128, %s392, %s379
        $region44: #{tpu_custom_call.1} parent=39 // pred_fallthru
          _
        // Predicated region
        $region45: #{tpu_custom_call.1} parent=39 // pred_check
          %p395 = pneg %p91
        $region46: #{tpu_custom_call.1} parent=39 // pred_check_branch
          %397 = sbr.rel (%p395) target = $region48
        $region47: #{tpu_custom_call.1} parent=39 // pred_region
          %s398 = sand.u32 %s31, 1
          %s399 = scalar_lea.sflag [#allocation6], %s398
          %s400 = sand.u32 %s81, 1
          %s401 = smul.addr %s400, 8
          %s402 = scalar_lea.vmem [#allocation5], %s401
          %404 = vsyncadd %s399, 0
          %s405 = smul.addr %s38, 8
          %s406 = scalar_lea.hbm %s1, %s405
          %s408 = sshll.u32 %s406, 4
          %s409 = int_to_ptr.hbm [resolvable:$true] %s408
          %s410 = sshll.u32 %s402, 4
          %s411 = int_to_ptr.vmem [resolvable:$true] %s410
          %413 = dma.hbm_to_vmem [thread:$0]  %s409, 128, %s411, %s399
        $region48: #{tpu_custom_call.1} parent=39 // pred_fallthru
          _
        // Predicated region
        $region49: #{tpu_custom_call.1} parent=39 // pred_check
          %p414 = pneg %p117
        $region50: #{tpu_custom_call.1} parent=39 // pred_check_branch
          %416 = sbr.rel (%p414) target = $region52
        $region51: #{tpu_custom_call.1} parent=39 // pred_region
          %s417 = sand.u32 %s31, 1
          %s418 = scalar_lea.sflag [#allocation6], %s417
          %s419 = sand.u32 %s107, 1
          %s420 = smul.addr %s419, 8
          %s421 = scalar_lea.vmem [#allocation7], %s420
          %423 = vsyncadd %s418, 0
          %s424 = smul.addr %s38, 8
          %s425 = scalar_lea.hbm %s2, %s424
          %s427 = sshll.u32 %s425, 4
          %s428 = int_to_ptr.hbm [resolvable:$true] %s427
          %s429 = sshll.u32 %s421, 4
          %s430 = int_to_ptr.vmem [resolvable:$true] %s429
          %432 = dma.hbm_to_vmem [thread:$0]  %s428, 128, %s430, %s418
        $region52: #{tpu_custom_call.1} parent=39 // pred_fallthru
          _
      $region40: #{tpu_custom_call.1} parent=5 // pred_fallthru
        _
      %p433 = scmp.le.s32.totalorder 1, %s31
      %p434 = scmp.lt.s32.totalorder %s31, 3
      %p435 = pnand %p433, %p434
      %p436 = pneg %p435
      // Predicated region
      $region53: #{tpu_custom_call.1} parent=5 // pred_check
        _
      $region54: #{tpu_custom_call.1} parent=5 // pred_check_branch
        %438 = sbr.rel (%p435) target = $region56
      $region55: #{tpu_custom_call.1} parent=5 // pred_region
        %s439 = ssub.s32 %s31, 1
        %s440 = sand.u32 %s58, 1
        %s441 = scalar_lea.sflag [#allocation3], %s440
        %s442 = sand.u32 %s58, 1
        %s443 = smul.addr %s442, 8
        %s444 = scalar_lea.vmem [#allocation2], %s443
        // Predicated region
        $region57: #{tpu_custom_call.1} parent=55 // pred_check
          %p445 = pneg %p71
        $region58: #{tpu_custom_call.1} parent=55 // pred_check_branch
          %447 = sbr.rel (%p445) target = $region60
        $region59: #{tpu_custom_call.1} parent=55 // pred_region
          %449 = dma.done %s441, 128
        $region60: #{tpu_custom_call.1} parent=55 // pred_fallthru
          _
        %s450 = sand.u32 %s36, 1
        %s451 = scalar_lea.sflag [#allocation6], %s450
        %s452 = sand.u32 %s84, 1
        %s453 = smul.addr %s452, 8
        %s454 = scalar_lea.vmem [#allocation5], %s453
        // Predicated region
        $region61: #{tpu_custom_call.1} parent=55 // pred_check
          %p455 = pneg %p97
        $region62: #{tpu_custom_call.1} parent=55 // pred_check_branch
          %457 = sbr.rel (%p455) target = $region64
        $region63: #{tpu_custom_call.1} parent=55 // pred_region
          %459 = dma.done %s451, 128
        $region64: #{tpu_custom_call.1} parent=55 // pred_fallthru
          _
        %s460 = sand.u32 %s36, 1
        %s461 = scalar_lea.sflag [#allocation6], %s460
        %s462 = sand.u32 %s110, 1
        %s463 = smul.addr %s462, 8
        %s464 = scalar_lea.vmem [#allocation7], %s463
        // Predicated region
        $region65: #{tpu_custom_call.1} parent=55 // pred_check
          %p465 = pneg %p123
        $region66: #{tpu_custom_call.1} parent=55 // pred_check_branch
          %467 = sbr.rel (%p465) target = $region68
        $region67: #{tpu_custom_call.1} parent=55 // pred_region
          %469 = dma.done %s461, 128
        $region68: #{tpu_custom_call.1} parent=55 // pred_fallthru
          _
        // Predicated region
        $region69: #{tpu_custom_call.1} parent=55 // pred_check
          %p470 = pneg %p144
        $region70: #{tpu_custom_call.1} parent=55 // pred_check_branch
          %472 = sbr.rel (%p470) target = $region72
        $region71: #{tpu_custom_call.1} parent=55 // pred_region
          %474 = dma.done [#allocation9], 512
        $region72: #{tpu_custom_call.1} parent=55 // pred_fallthru
          _
        // Predicated region
        $region73: #{tpu_custom_call.1} parent=55 // pred_check
          %p475 = pneg %p165
        $region74: #{tpu_custom_call.1} parent=55 // pred_check_branch
          %477 = sbr.rel (%p475) target = $region76
        $region75: #{tpu_custom_call.1} parent=55 // pred_region
          %479 = dma.done [#allocation9], 512
        $region76: #{tpu_custom_call.1} parent=55 // pred_fallthru
          _
        // Predicated region
        $region77: #{tpu_custom_call.1} parent=55 // pred_check
          %p480 = pneg %p186
        $region78: #{tpu_custom_call.1} parent=55 // pred_check_branch
          %482 = sbr.rel (%p480) target = $region80
        $region79: #{tpu_custom_call.1} parent=55 // pred_region
          %484 = dma.done [#allocation12], 512
        $region80: #{tpu_custom_call.1} parent=55 // pred_fallthru
          _
        %s485 = sand.u32 %s58, 1
        %s486 = scalar_lea.sflag [#allocation3], %s485
        %s487 = sand.u32 %s58, 1
        %s488 = smul.addr %s487, 8
        %s489 = scalar_lea.vmem [#allocation2], %s488
        %p490 = pneg %p71
        %p491 = pneg %p68
        %s492 = sand.u32 %s36, 1
        %s493 = scalar_lea.sflag [#allocation6], %s492
        %s494 = sand.u32 %s84, 1
        %s495 = smul.addr %s494, 8
        %s496 = scalar_lea.vmem [#allocation5], %s495
        %p497 = pneg %p97
        %p498 = pneg %p94
        %s499 = sand.u32 %s36, 1
        %s500 = scalar_lea.sflag [#allocation6], %s499
        %s501 = sand.u32 %s110, 1
        %s502 = smul.addr %s501, 8
        %s503 = scalar_lea.vmem [#allocation7], %s502
        %p504 = pneg %p123
        %p505 = pneg %p120
        %p506 = pneg %p144
        %p507 = pneg %p141
        %p508 = pneg %p165
        %p509 = pneg %p162
        %p510 = pneg %p186
        %p511 = pneg %p183
        %p512 = pneg %p207
        %p513 = pneg %p204
        %p514 = pneg %p228
        %p515 = pneg %p225
        %p516 = pneg %p249
        %p517 = pneg %p246
        %p518 = pneg %p277
        %p519 = pneg %p274
        %s520 = sand.u32 %s264, 1
        %s521 = scalar_lea.sflag [#allocation4], %s520
        %s522 = sand.u32 %s264, 1
        %s523 = smul.addr %s522, 8
        %s524 = scalar_lea.vmem [#allocation13], %s523
        %p525 = pneg %p305
        %p526 = pneg %p302
        %s527 = sand.u32 %s292, 1
        %s528 = scalar_lea.sflag [#allocation15], %s527
        %s529 = sand.u32 %s292, 1
        %s530 = smul.addr %s529, 32
        %s531 = scalar_lea.vmem [#allocation14], %s530
        %v532 = vld [vmem:[%s444] sm:$0xff]
        %v533 = vld [vmem:[%s454] sm:$0xff]
        %v534 = vld [vmem:[%s464] sm:$0xff]
        %v535 = vld [vmem:[#allocation8] sm:$0xff]
        %v536 = vld [vmem:[#allocation8 + $0x8] sm:$0xff]
        %v537 = vld [vmem:[#allocation8 + $0x10] sm:$0xff]
        %v538 = vld [vmem:[#allocation8 + $0x18] sm:$0xff]
        %v539 = vld [vmem:[%s6] sm:$0x1]
        %v541 = vperm.slane %v539, 0
        %vm543 = vcmask 261120
        %v545 = vsel %vm543, %v532, 0
        %547 = vmatpush.msra.mxu0 0.0
        %548 = vmatpush.msra.mxu0 0.0
        %549 = vmatpush.msra.mxu0 0.0
        %550 = vmatpush.msra.mxu0 0.0
        %551 = vmatpush.msra.mxu0 0.0
        %552 = vmatpush.msra.mxu0 0.0
        %553 = vmatpush.msra.mxu0 0.0
        %554 = vmatpush.msra.mxu0 0.0
        %555 = vmatpush.msra.mxu0 0.0
        %556 = vmatpush.msra.mxu0 0.0
        %557 = vmatpush.msra.mxu0 0.0
        %558 = vmatpush.msra.mxu0 0.0
        %559 = vmatpush.msra.mxu0 %v538
        %560 = vmatpush.msra.mxu0 %v537
        %561 = vmatpush.msra.mxu0 %v536
        %562 = vmatpush.msra.mxu0 %v535
        %563 = vmatmul.f32.gmra.mxu0 %v545
        %v564 = vpop.f32.mrf.mxu0
        %v565 = vadd.f32 %v541, %v564
        %566 = vdwg.mxu0
        %v567 = vld [vmem:[#allocation10] sm:$0xff]
        %v568 = vld [vmem:[#allocation10 + $0x8] sm:$0xff]
        %v569 = vld [vmem:[#allocation10 + $0x10] sm:$0xff]
        %v570 = vld [vmem:[#allocation10 + $0x18] sm:$0xff]
        %v571 = vld [vmem:[%s7] sm:$0x1]
        %v573 = vperm.slane %v571, 0
        %v576 = vsel %vm543, %v533, 0
        %578 = vmatpush.msra.mxu0 0.0
        %579 = vmatpush.msra.mxu0 0.0
        %580 = vmatpush.msra.mxu0 0.0
        %581 = vmatpush.msra.mxu0 0.0
        %582 = vmatpush.msra.mxu0 0.0
        %583 = vmatpush.msra.mxu0 0.0
        %584 = vmatpush.msra.mxu0 0.0
        %585 = vmatpush.msra.mxu0 0.0
        %586 = vmatpush.msra.mxu0 0.0
        %587 = vmatpush.msra.mxu0 0.0
        %588 = vmatpush.msra.mxu0 0.0
        %589 = vmatpush.msra.mxu0 0.0
        %590 = vmatpush.msra.mxu0 %v570
        %591 = vmatpush.msra.mxu0 %v569
        %592 = vmatpush.msra.mxu0 %v568
        %593 = vmatpush.msra.mxu0 %v567
        %594 = vmatmul.f32.gmra.mxu0 %v576
        %v595 = vpop.f32.mrf.mxu0
        %v596 = vadd.f32 %v573, %v595
        %597 = vdwg.mxu0
        %v598 = vld [vmem:[#allocation11] sm:$0xff]
        %v599 = vld [vmem:[#allocation11 + $0x8] sm:$0xff]
        %v600 = vld [vmem:[#allocation11 + $0x10] sm:$0xff]
        %v601 = vld [vmem:[#allocation11 + $0x18] sm:$0xff]
        %v602 = vld [vmem:[%s8] sm:$0x1]
        %v604 = vperm.slane %v602, 0
        %v607 = vsel %vm543, %v534, 0
        %609 = vmatpush.msra.mxu0 0.0
        %610 = vmatpush.msra.mxu0 0.0
        %611 = vmatpush.msra.mxu0 0.0
        %612 = vmatpush.msra.mxu0 0.0
        %613 = vmatpush.msra.mxu0 0.0
        %614 = vmatpush.msra.mxu0 0.0
        %615 = vmatpush.msra.mxu0 0.0
        %616 = vmatpush.msra.mxu0 0.0
        %617 = vmatpush.msra.mxu0 0.0
        %618 = vmatpush.msra.mxu0 0.0
        %619 = vmatpush.msra.mxu0 0.0
        %620 = vmatpush.msra.mxu0 0.0
        %621 = vmatpush.msra.mxu0 %v601
        %622 = vmatpush.msra.mxu0 %v600
        %623 = vmatpush.msra.mxu0 %v599
        %624 = vmatpush.msra.mxu0 %v598
        %625 = vmatmul.f32.gmra.mxu0 %v607
        %v626 = vpop.f32.mrf.mxu0
        %v627 = vadd.f32 %v604, %v626
        %628 = vdwg.mxu0
        %vm629 = vcmask 64512
        %v631 = vsel %vm629, %v565, 0
        %v634 = vsel %vm629, %v596, 0
        %636 = vmatpush.xpose.msra.mxu0 0.0
        %637 = vmatpush.xpose.msra.mxu0 0.0
        %638 = vmatpush.xpose.msra.mxu0 0.0
        %639 = vmatpush.xpose.msra.mxu0 0.0
        %640 = vmatpush.xpose.msra.mxu0 0.0
        %641 = vmatpush.xpose.msra.mxu0 0.0
        %642 = vmatpush.xpose.msra.mxu0 0.0
        %643 = vmatpush.xpose.msra.mxu0 0.0
        %644 = vmatpush.xpose.msra.mxu0 0.0
        %645 = vmatpush.xpose.msra.mxu0 0.0
        %646 = vmatpush.xpose.msra.mxu0 0.0
        %647 = vmatpush.xpose.msra.mxu0 0.0
        %648 = vmatpush.xpose.msra.mxu0 0.0
        %649 = vmatpush.xpose.msra.mxu0 0.0
        %650 = vmatpush.xpose.msra.mxu0 0.0
        %651 = vmatpush.xpose.msra.mxu0 %v634
        %652 = vmatmul.f32.gmra.mxu0 %v631
        %v653 = vpop.f32.mrf.mxu0
        %v654 = vadd.f32 0.0, %v653
        %655 = vdwg.mxu0
        %v656 = vsel %vm629, %v654, -inf
        %657 = vmax.xlane.f32.xlu0 %v656
        %v658 = vpop.xlane.xlu0 %657
        %v659 = vsub.f32 %v654, %v658
        %v660 = vmul.f32 %v659, 1.442695
        %v661 = vpow.pop %v660
        %v662 = vsel %vm629, %v661, 0.0
        %663 = vadd.xlane.f32.xlu0 %v662
        %v664 = vpop.xlane.xlu0 %663
        %v665 = vrcp.pop %v664
        %v666 = vmul.f32 %v664, %v665
        %v667 = vsub.f32 1.0, %v666
        %v668 = vmul.f32 %v665, %v667
        %v669 = vadd.f32 %v665, %v668
        %vm670 = vweird.f32 %v664
        %vm671 = vweird.f32 %v665
        %vm672 = vmor %vm670, %vm671
        %v673 = vsel %vm672, %v665, %v669
        %v674 = vand.u32 2147483647, %v664
        %vm675 = vcmp.eq.f32.partialorder %v674, 8.507059e+37
        %v676 = vand.u32 %v664, 2147483648
        %v677 = vor.u32 1.1754944e-38, %v676
        %v678 = vsel %vm675, %v677, %v673
        %v679 = vmul.f32 %v661, %v678
        %v681 = vsel %vm629, %v679, 0
        %683 = vmatpush.msra.mxu0 0.0
        %684 = vmatpush.msra.mxu0 0.0
        %685 = vmatpush.msra.mxu0 0.0
        %686 = vmatpush.msra.mxu0 0.0
        %687 = vmatpush.msra.mxu0 0.0
        %688 = vmatpush.msra.mxu0 0.0
        %689 = vmatpush.msra.mxu0 0.0
        %690 = vmatpush.msra.mxu0 0.0
        %691 = vmatpush.msra.mxu0 0.0
        %692 = vmatpush.msra.mxu0 0.0
        %693 = vmatpush.msra.mxu0 0.0
        %694 = vmatpush.msra.mxu0 0.0
        %695 = vmatpush.msra.mxu0 0.0
        %696 = vmatpush.msra.mxu0 0.0
        %697 = vmatpush.msra.mxu0 0.0
        %698 = vmatpush.msra.mxu0 %v627
        %699 = vmatmul.f32.gmra.mxu0 %v681
        %v700 = vpop.f32.mrf.mxu0
        %v701 = vadd.f32 0.0, %v700
        %702 = vdwg.mxu0
        %703 = vst.msk [vmem:[%s524] sm:$0xff] %vm629, %v701
        %704 = vst.msk [vmem:[%s531] sm:$0xff] %vm629, %v679
        %705 = vrot.lane.b32.xlu0 %v565, 120
        %v706 = vpop.permute.xlu0 %705
        %707 = vrot.lane.b32.xlu0 %v596, 120
        %v708 = vpop.permute.xlu0 %707
        %v709 = vsel %vm629, %v706, 0
        %v711 = vsel %vm629, %v708, 0
        %713 = vmatpush.xpose.msra.mxu0 0.0
        %714 = vmatpush.xpose.msra.mxu0 0.0
        %715 = vmatpush.xpose.msra.mxu0 0.0
        %716 = vmatpush.xpose.msra.mxu0 0.0
        %717 = vmatpush.xpose.msra.mxu0 0.0
        %718 = vmatpush.xpose.msra.mxu0 0.0
        %719 = vmatpush.xpose.msra.mxu0 0.0
        %720 = vmatpush.xpose.msra.mxu0 0.0
        %721 = vmatpush.xpose.msra.mxu0 0.0
        %722 = vmatpush.xpose.msra.mxu0 0.0
        %723 = vmatpush.xpose.msra.mxu0 0.0
        %724 = vmatpush.xpose.msra.mxu0 0.0
        %725 = vmatpush.xpose.msra.mxu0 0.0
        %726 = vmatpush.xpose.msra.mxu0 0.0
        %727 = vmatpush.xpose.msra.mxu0 0.0
        %728 = vmatpush.xpose.msra.mxu0 %v711
        %729 = vmatmul.f32.gmra.mxu0 %v709
        %v730 = vpop.f32.mrf.mxu0
        %v731 = vadd.f32 0.0, %v730
        %732 = vdwg.mxu0
        %v733 = vsel %vm629, %v731, -inf
        %734 = vmax.xlane.f32.xlu0 %v733
        %v735 = vpop.xlane.xlu0 %734
        %v736 = vsub.f32 %v731, %v735
        %v737 = vmul.f32 %v736, 1.442695
        %v738 = vpow.pop %v737
        %v739 = vsel %vm629, %v738, 0.0
        %740 = vadd.xlane.f32.xlu0 %v739
        %v741 = vpop.xlane.xlu0 %740
        %v742 = vrcp.pop %v741
        %v743 = vmul.f32 %v741, %v742
        %v744 = vsub.f32 1.0, %v743
        %v745 = vmul.f32 %v742, %v744
        %v746 = vadd.f32 %v742, %v745
        %vm747 = vweird.f32 %v741
        %vm748 = vweird.f32 %v742
        %vm749 = vmor %vm747, %vm748
        %v750 = vsel %vm749, %v742, %v746
        %v751 = vand.u32 2147483647, %v741
        %vm752 = vcmp.eq.f32.partialorder %v751, 8.507059e+37
        %v753 = vand.u32 %v741, 2147483648
        %v754 = vor.u32 1.1754944e-38, %v753
        %v755 = vsel %vm752, %v754, %v750
        %v756 = vmul.f32 %v738, %v755
        %758 = vrot.lane.b32.xlu0 %v627, 120
        %v759 = vpop.permute.xlu0 %758
        %v762 = vsel %vm629, %v756, 0
        %764 = vmatpush.msra.mxu0 0.0
        %765 = vmatpush.msra.mxu0 0.0
        %766 = vmatpush.msra.mxu0 0.0
        %767 = vmatpush.msra.mxu0 0.0
        %768 = vmatpush.msra.mxu0 0.0
        %769 = vmatpush.msra.mxu0 0.0
        %770 = vmatpush.msra.mxu0 0.0
        %771 = vmatpush.msra.mxu0 0.0
        %772 = vmatpush.msra.mxu0 0.0
        %773 = vmatpush.msra.mxu0 0.0
        %774 = vmatpush.msra.mxu0 0.0
        %775 = vmatpush.msra.mxu0 0.0
        %776 = vmatpush.msra.mxu0 0.0
        %777 = vmatpush.msra.mxu0 0.0
        %778 = vmatpush.msra.mxu0 0.0
        %779 = vmatpush.msra.mxu0 %v759
        %780 = vmatmul.f32.gmra.mxu0 %v762
        %v781 = vpop.f32.mrf.mxu0
        %v782 = vadd.f32 0.0, %v781
        %783 = vdwg.mxu0
        %785 = vrot.lane.b32.xlu0 %v782, 8
        %v786 = vpop.permute.xlu0 %785
        %vm788 = vcmask 130112
        %789 = vst.msk [vmem:[%s524] sm:$0xff] %vm788, %v786
        %s790 = scalar_lea.vmem %s531, 8 [#allocation14]
        %791 = vst.msk [vmem:[%s790] sm:$0xff] %vm629, %v756
        %792 = vrot.lane.b32.xlu0 %v565, 112
        %v793 = vpop.permute.xlu0 %792
        %794 = vrot.lane.b32.xlu0 %v596, 112
        %v795 = vpop.permute.xlu0 %794
        %v796 = vsel %vm629, %v793, 0
        %v798 = vsel %vm629, %v795, 0
        %800 = vmatpush.xpose.msra.mxu0 0.0
        %801 = vmatpush.xpose.msra.mxu0 0.0
        %802 = vmatpush.xpose.msra.mxu0 0.0
        %803 = vmatpush.xpose.msra.mxu0 0.0
        %804 = vmatpush.xpose.msra.mxu0 0.0
        %805 = vmatpush.xpose.msra.mxu0 0.0
        %806 = vmatpush.xpose.msra.mxu0 0.0
        %807 = vmatpush.xpose.msra.mxu0 0.0
        %808 = vmatpush.xpose.msra.mxu0 0.0
        %809 = vmatpush.xpose.msra.mxu0 0.0
        %810 = vmatpush.xpose.msra.mxu0 0.0
        %811 = vmatpush.xpose.msra.mxu0 0.0
        %812 = vmatpush.xpose.msra.mxu0 0.0
        %813 = vmatpush.xpose.msra.mxu0 0.0
        %814 = vmatpush.xpose.msra.mxu0 0.0
        %815 = vmatpush.xpose.msra.mxu0 %v798
        %816 = vmatmul.f32.gmra.mxu0 %v796
        %v817 = vpop.f32.mrf.mxu0
        %v818 = vadd.f32 0.0, %v817
        %819 = vdwg.mxu0
        %v820 = vsel %vm629, %v818, -inf
        %821 = vmax.xlane.f32.xlu0 %v820
        %v822 = vpop.xlane.xlu0 %821
        %v823 = vsub.f32 %v818, %v822
        %v824 = vmul.f32 %v823, 1.442695
        %v825 = vpow.pop %v824
        %v826 = vsel %vm629, %v825, 0.0
        %827 = vadd.xlane.f32.xlu0 %v826
        %v828 = vpop.xlane.xlu0 %827
        %v829 = vrcp.pop %v828
        %v830 = vmul.f32 %v828, %v829
        %v831 = vsub.f32 1.0, %v830
        %v832 = vmul.f32 %v829, %v831
        %v833 = vadd.f32 %v829, %v832
        %vm834 = vweird.f32 %v828
        %vm835 = vweird.f32 %v829
        %vm836 = vmor %vm834, %vm835
        %v837 = vsel %vm836, %v829, %v833
        %v838 = vand.u32 2147483647, %v828
        %vm839 = vcmp.eq.f32.partialorder %v838, 8.507059e+37
        %v840 = vand.u32 %v828, 2147483648
        %v841 = vor.u32 1.1754944e-38, %v840
        %v842 = vsel %vm839, %v841, %v837
        %v843 = vmul.f32 %v825, %v842
        %844 = vrot.lane.b32.xlu0 %v627, 112
        %v845 = vpop.permute.xlu0 %844
        %v848 = vsel %vm629, %v843, 0
        %850 = vmatpush.msra.mxu0 0.0
        %851 = vmatpush.msra.mxu0 0.0
        %852 = vmatpush.msra.mxu0 0.0
        %853 = vmatpush.msra.mxu0 0.0
        %854 = vmatpush.msra.mxu0 0.0
        %855 = vmatpush.msra.mxu0 0.0
        %856 = vmatpush.msra.mxu0 0.0
        %857 = vmatpush.msra.mxu0 0.0
        %858 = vmatpush.msra.mxu0 0.0
        %859 = vmatpush.msra.mxu0 0.0
        %860 = vmatpush.msra.mxu0 0.0
        %861 = vmatpush.msra.mxu0 0.0
        %862 = vmatpush.msra.mxu0 0.0
        %863 = vmatpush.msra.mxu0 0.0
        %864 = vmatpush.msra.mxu0 0.0
        %865 = vmatpush.msra.mxu0 %v845
        %866 = vmatmul.f32.gmra.mxu0 %v848
        %v867 = vpop.f32.mrf.mxu0
        %v868 = vadd.f32 0.0, %v867
        %869 = vdwg.mxu0
        %871 = vrot.lane.b32.xlu0 %v868, 16
        %v872 = vpop.permute.xlu0 %871
        %vm874 = vcmask 195712
        %875 = vst.msk [vmem:[%s524] sm:$0xff] %vm874, %v872
        %s876 = scalar_lea.vmem %s531, 16 [#allocation14]
        %877 = vst.msk [vmem:[%s876] sm:$0xff] %vm629, %v843
        %878 = vrot.lane.b32.xlu0 %v565, 104
        %v879 = vpop.permute.xlu0 %878
        %880 = vrot.lane.b32.xlu0 %v596, 104
        %v881 = vpop.permute.xlu0 %880
        %v882 = vsel %vm629, %v879, 0
        %v884 = vsel %vm629, %v881, 0
        %886 = vmatpush.xpose.msra.mxu0 0.0
        %887 = vmatpush.xpose.msra.mxu0 0.0
        %888 = vmatpush.xpose.msra.mxu0 0.0
        %889 = vmatpush.xpose.msra.mxu0 0.0
        %890 = vmatpush.xpose.msra.mxu0 0.0
        %891 = vmatpush.xpose.msra.mxu0 0.0
        %892 = vmatpush.xpose.msra.mxu0 0.0
        %893 = vmatpush.xpose.msra.mxu0 0.0
        %894 = vmatpush.xpose.msra.mxu0 0.0
        %895 = vmatpush.xpose.msra.mxu0 0.0
        %896 = vmatpush.xpose.msra.mxu0 0.0
        %897 = vmatpush.xpose.msra.mxu0 0.0
        %898 = vmatpush.xpose.msra.mxu0 0.0
        %899 = vmatpush.xpose.msra.mxu0 0.0
        %900 = vmatpush.xpose.msra.mxu0 0.0
        %901 = vmatpush.xpose.msra.mxu0 %v884
        %902 = vmatmul.f32.gmra.mxu0 %v882
        %v903 = vpop.f32.mrf.mxu0
        %v904 = vadd.f32 0.0, %v903
        %905 = vdwg.mxu0
        %v906 = vsel %vm629, %v904, -inf
        %907 = vmax.xlane.f32.xlu0 %v906
        %v908 = vpop.xlane.xlu0 %907
        %v909 = vsub.f32 %v904, %v908
        %v910 = vmul.f32 %v909, 1.442695
        %v911 = vpow.pop %v910
        %v912 = vsel %vm629, %v911, 0.0
        %913 = vadd.xlane.f32.xlu0 %v912
        %v914 = vpop.xlane.xlu0 %913
        %v915 = vrcp.pop %v914
        %v916 = vmul.f32 %v914, %v915
        %v917 = vsub.f32 1.0, %v916
        %v918 = vmul.f32 %v915, %v917
        %v919 = vadd.f32 %v915, %v918
        %vm920 = vweird.f32 %v914
        %vm921 = vweird.f32 %v915
        %vm922 = vmor %vm920, %vm921
        %v923 = vsel %vm922, %v915, %v919
        %v924 = vand.u32 2147483647, %v914
        %vm925 = vcmp.eq.f32.partialorder %v924, 8.507059e+37
        %v926 = vand.u32 %v914, 2147483648
        %v927 = vor.u32 1.1754944e-38, %v926
        %v928 = vsel %vm925, %v927, %v923
        %v929 = vmul.f32 %v911, %v928
        %930 = vrot.lane.b32.xlu0 %v627, 104
        %v931 = vpop.permute.xlu0 %930
        %v934 = vsel %vm629, %v929, 0
        %936 = vmatpush.msra.mxu0 0.0
        %937 = vmatpush.msra.mxu0 0.0
        %938 = vmatpush.msra.mxu0 0.0
        %939 = vmatpush.msra.mxu0 0.0
        %940 = vmatpush.msra.mxu0 0.0
        %941 = vmatpush.msra.mxu0 0.0
        %942 = vmatpush.msra.mxu0 0.0
        %943 = vmatpush.msra.mxu0 0.0
        %944 = vmatpush.msra.mxu0 0.0
        %945 = vmatpush.msra.mxu0 0.0
        %946 = vmatpush.msra.mxu0 0.0
        %947 = vmatpush.msra.mxu0 0.0
        %948 = vmatpush.msra.mxu0 0.0
        %949 = vmatpush.msra.mxu0 0.0
        %950 = vmatpush.msra.mxu0 0.0
        %951 = vmatpush.msra.mxu0 %v931
        %952 = vmatmul.f32.gmra.mxu0 %v934
        %v953 = vpop.f32.mrf.mxu0
        %v954 = vadd.f32 0.0, %v953
        %955 = vdwg.mxu0
        %957 = vrot.lane.b32.xlu0 %v954, 24
        %v958 = vpop.permute.xlu0 %957
        %vm960 = vcmask 261312
        %961 = vst.msk [vmem:[%s524] sm:$0xff] %vm960, %v958
        %s962 = scalar_lea.vmem %s531, 24 [#allocation14]
        %963 = vst.msk [vmem:[%s962] sm:$0xff] %vm629, %v929
        %s964 = sand.u32 %s264, 1
        %s965 = scalar_lea.sflag [#allocation4], %s964
        %s966 = sand.u32 %s264, 1
        %s967 = smul.addr %s966, 8
        %s968 = scalar_lea.vmem [#allocation13], %s967
        %s969 = sand.u32 %s292, 1
        %s970 = scalar_lea.sflag [#allocation15], %s969
        %s971 = sand.u32 %s292, 1
        %s972 = smul.addr %s971, 32
        %s973 = scalar_lea.vmem [#allocation14], %s972
        // Predicated region
        $region81: #{tpu_custom_call.1} parent=55 // pred_check
          %p974 = pneg %p274
        $region82: #{tpu_custom_call.1} parent=55 // pred_check_branch
          %976 = sbr.rel (%p974) target = $region84
        $region83: #{tpu_custom_call.1} parent=55 // pred_region
          %978 = vsyncadd %s965, 0
          %s979 = sadd.s32 %s41, %s40
          %s980 = smul.addr %s979, 8
          %s981 = scalar_lea.hbm %s9, %s980
          %s983 = sshll.u32 %s968, 4
          %s984 = int_to_ptr.vmem [resolvable:$true] %s983
          %s985 = sshll.u32 %s981, 4
          %s986 = int_to_ptr.hbm [resolvable:$true] %s985
          %988 = dma.vmem_to_hbm [thread:$0]  %s984, 128, %s986, %s965
        $region84: #{tpu_custom_call.1} parent=55 // pred_fallthru
          _
        // Predicated region
        $region85: #{tpu_custom_call.1} parent=55 // pred_check
          %p989 = pneg %p302
        $region86: #{tpu_custom_call.1} parent=55 // pred_check_branch
          %991 = sbr.rel (%p989) target = $region88
        $region87: #{tpu_custom_call.1} parent=55 // pred_region
          %993 = vsyncadd %s970, 0
          %s994 = sadd.s32 %s41, %s40
          %s995 = smul.addr %s994, 8
          %s996 = scalar_lea.hbm %s10, %s995
          %s997 = sshll.u32 %s973, 4
          %s998 = int_to_ptr.vmem [resolvable:$true] %s997
          %s999 = sshll.u32 %s996, 4
          %s1000 = int_to_ptr.hbm [resolvable:$true] %s999
          %1005 = dma.vmem_to_hbm [thread:$0]  %s998, 512, %s1000, %s970, 128, 256, 8
        $region88: #{tpu_custom_call.1} parent=55 // pred_fallthru
          _
      $region56: #{tpu_custom_call.1} parent=5 // pred_fallthru
        _
      %p1006 = scmp.le.s32.totalorder 2, %s31
      // Predicated region
      $region89: #{tpu_custom_call.1} parent=5 // pred_check
        %p1007 = pneg %p1006
      $region90: #{tpu_custom_call.1} parent=5 // pred_check_branch
        %1009 = sbr.rel (%p1007) target = $region92
      $region91: #{tpu_custom_call.1} parent=5 // pred_region
        %s1010 = ssub.s32 %s31, 2
        // Predicated region
        $region93: #{tpu_custom_call.1} parent=91 // pred_check
          %p1011 = pneg %p280
        $region94: #{tpu_custom_call.1} parent=91 // pred_check_branch
          %1013 = sbr.rel (%p1011) target = $region96
        $region95: #{tpu_custom_call.1} parent=91 // pred_region
          %s1014 = sand.u32 %s265, 1
          %s1015 = scalar_lea.sflag [#allocation4], %s1014
          %s1016 = sand.u32 %s265, 1
          %s1017 = smul.addr %s1016, 8
          %s1018 = scalar_lea.vmem [#allocation13], %s1017
          %1020 = dma.done %s1015, 128
        $region96: #{tpu_custom_call.1} parent=91 // pred_fallthru
          _
        // Predicated region
        $region97: #{tpu_custom_call.1} parent=91 // pred_check
          %p1021 = pneg %p308
        $region98: #{tpu_custom_call.1} parent=91 // pred_check_branch
          %1023 = sbr.rel (%p1021) target = $region100
        $region99: #{tpu_custom_call.1} parent=91 // pred_region
          %s1024 = sand.u32 %s293, 1
          %s1025 = scalar_lea.sflag [#allocation15], %s1024
          %s1026 = sand.u32 %s293, 1
          %s1027 = smul.addr %s1026, 32
          %s1028 = scalar_lea.vmem [#allocation14], %s1027
          %1030 = dma.done %s1025, 512
        $region100: #{tpu_custom_call.1} parent=91 // pred_fallthru
          _
      $region92: #{tpu_custom_call.1} parent=5 // pred_fallthru
        _
    $region6: #{tpu_custom_call.1} parent=1 // loop_footer
      %s35 = sadd.s32 1, %s31
    $region7: #{tpu_custom_call.1} parent=1 // loop_footer_branch
      %30 = sbr.rel target = $region3
    $region8: #{tpu_custom_call.1} parent=1 // loop_exit
      _
    %1031 = vsyncpa [#allocation3], 1
    %s1032 = scalar_lea.sflag [#allocation3], 1
    %1033 = vsyncpa %s1032, 1
    %1034 = vsyncpa [#allocation6], 1
    %s1035 = scalar_lea.sflag [#allocation6], 1
    %1036 = vsyncpa %s1035, 1
    %1037 = vsyncpa [#allocation9], 1
    %1038 = vsyncpa [#allocation12], 1
    %1039 = vsyncpa [#allocation4], 1
    %s1040 = scalar_lea.sflag [#allocation4], 1
    %1041 = vsyncpa %s1040, 1
    %1042 = vsyncpa [#allocation15], 1
    %s1043 = scalar_lea.sflag [#allocation15], 1
    %1044 = vsyncpa %s1043, 1

// kernel: tpu_custom_call.1
$region0: #{tpu_custom_call.1}
  #allocation0 [shape = 'u32[]', space=smem, size = 0x4, offset = 0x4, fixed_abs, tag = 'smem constant byte address 0x4 - core index']
  #allocation1 [shape = 'u32[72,128]{1,0:T(1,128)}', space=vmem, size = 0x9000, scoped, tag = 'internal scratch']
  %s0 = inlined_call_operand.hbm [shape: f32[2,8,32], index: 0, kind: input, shape index: {}]
  %s1 = inlined_call_operand.hbm [shape: f32[2,8,32], index: 1, kind: input, shape index: {}]
  %s2 = inlined_call_operand.hbm [shape: f32[2,8,32], index: 2, kind: input, shape index: {}]
  %s3 = inlined_call_operand.hbm [shape: f32[32,32], index: 3, kind: input, shape index: {}]
  %s4 = inlined_call_operand.hbm [shape: f32[32,32], index: 4, kind: input, shape index: {}]
  %s5 = inlined_call_operand.hbm [shape: f32[32,32], index: 5, kind: input, shape index: {}]
  %s6 = inlined_call_operand.vmem [shape: f32[1,32], index: 6, kind: input, shape index: {}]
  %s7 = inlined_call_operand.vmem [shape: f32[1,32], index: 7, kind: input, shape index: {}]
  %s8 = inlined_call_operand.vmem [shape: f32[1,32], index: 8, kind: input, shape index: {}]
  %s9 = inlined_call_operand.hbm [shape: f32[2,8,32], index: 9, kind: output, shape index: {0}]
  %s10 = inlined_call_operand.hbm [shape: f32[4,2,8,8], index: 10, kind: output, shape index: {1}]
  %11 = xla_tuple %s9, %s10
  %s12 = sld [smem:[#allocation0]]
  $region101: #{tpu_custom_call.1} parent=0
    _
  %s14 = ssub.s32 1, %s12
  %s15 = scalar_select 0, %s14, %s12
  $region1: #{tpu_custom_call.1} parent=0
    #allocation2 [shape = 'u8[8192]{0}', space=vmem, size = 0x2000, scoped, tag = 'input window, operand 0']
    #allocation3 [shape = 's32[2]{0}', space=sflag, size = 0x8, scoped, tag = 'scoped memory for tpu_custom_call.1']
    #allocation4 [shape = 's32[2]{0}', space=sflag, size = 0x8, scoped, tag = 'scoped memory for tpu_custom_call.1']
    #allocation5 [shape = 'u8[8192]{0}', space=vmem, size = 0x2000, scoped, tag = 'input window, operand 1']
    #allocation6 [shape = 's32[2]{0}', space=sflag, size = 0x8, scoped, tag = 'scoped memory for tpu_custom_call.1']
    #allocation7 [shape = 'u8[8192]{0}', space=vmem, size = 0x2000, scoped, tag = 'input window, operand 2']
    #allocation8 [shape = 'u8[16384]{0}', space=vmem, size = 0x4000, scoped, tag = 'input window, operand 3, single buffered']
    #allocation9 [shape = 's32[1]{0}', space=sflag, size = 0x4, scoped, tag = 'scoped memory for tpu_custom_call.1']
    #allocation10 [shape = 'u8[16384]{0}', space=vmem, size = 0x4000, scoped, tag = 'input window, operand 4, single buffered']
    #allocation11 [shape = 'u8[16384]{0}', space=vmem, size = 0x4000, scoped, tag = 'input window, operand 5, single buffered']
    #allocation12 [shape = 's32[1]{0}', space=sflag, size = 0x4, scoped, tag = 'scoped memory for tpu_custom_call.1']
    #allocation13 [shape = 'u8[8192]{0}', space=vmem, size = 0x2000, scoped, tag = 'output window, operand 0']
    #allocation14 [shape = 'u8[32768]{0}', space=vmem, size = 0x8000, scoped, tag = 'output window, operand 1']
    #allocation15 [shape = 's32[2]{0}', space=sflag, size = 0x8, scoped, tag = 'scoped memory for tpu_custom_call.1']
    %16 = vsyncpa [#allocation3], 0
    %s17 = scalar_lea.sflag [#allocation3], 1
    %18 = vsyncpa %s17, 0
    %19 = vsyncpa [#allocation6], 0
    %s20 = scalar_lea.sflag [#allocation6], 1
    %21 = vsyncpa %s20, 0
    %22 = vsyncpa [#allocation9], 0
    %23 = vsyncpa [#allocation12], 0
    %24 = vsyncpa [#allocation4], 0
    %s25 = scalar_lea.sflag [#allocation4], 1
    %26 = vsyncpa %s25, 0
    %27 = vsyncpa [#allocation15], 0
    %s28 = scalar_lea.sflag [#allocation15], 1
    %29 = vsyncpa %s28, 0
    loop: start=0, step=1, limit=4
    $region2: #{tpu_custom_call.1} parent=1 // loop_pre_header
      _
    $region3: #{tpu_custom_call.1} parent=1 // loop_header
      %s31 = sphi 0, %s35
      %p32 = scmp.ge.s32.totalorder %s31, 4
      %s38 = sphi 0, %s50
      %s39 = sphi 0, %s46
      %s40 = sphi 0, %s38
      %s41 = sphi 0, %s39
      %s42 = sphi 0, %s40
      %s43 = sphi 0, %s41
      %s55 = sphi 0, %s57
      %s58 = sphi 0, %s55
      %s59 = sphi 0, %s58
      %s75 = sphi 0, %s59
      %s81 = sphi 0, %s83
      %s84 = sphi 0, %s81
      %s85 = sphi 0, %s84
      %s101 = sphi 0, %s85
      %s107 = sphi 0, %s109
      %s110 = sphi 0, %s107
      %s111 = sphi 0, %s110
      %s127 = sphi 0, %s111
      %s131 = sphi 0, %s131
      %s133 = sphi 0, %s131
      %s134 = sphi 0, %s133
      %s148 = sphi 0, %s134
      %s152 = sphi 0, %s152
      %s154 = sphi 0, %s152
      %s155 = sphi 0, %s154
      %s169 = sphi 0, %s155
      %s173 = sphi 0, %s173
      %s175 = sphi 0, %s173
      %s176 = sphi 0, %s175
      %s190 = sphi 0, %s176
      %s194 = sphi 0, %s194
      %s196 = sphi 0, %s194
      %s197 = sphi 0, %s196
      %s211 = sphi 0, %s197
      %s215 = sphi 0, %s215
      %s217 = sphi 0, %s215
      %s218 = sphi 0, %s217
      %s232 = sphi 0, %s218
      %s236 = sphi 0, %s236
      %s238 = sphi 0, %s236
      %s239 = sphi 0, %s238
      %s253 = sphi 0, %s239
      %s261 = sphi 0, %s263
      %s264 = sphi 0, %s261
      %s265 = sphi 0, %s264
      %s281 = sphi 0, %s265
      %s289 = sphi 0, %s291
      %s292 = sphi 0, %s289
      %s293 = sphi 0, %s292
      %s309 = sphi 0, %s293
    $region4: #{tpu_custom_call.1} parent=1 // loop_header_branch
      %34 = sbr.rel (%p32) target = $region8
    $region5: #{tpu_custom_call.1} parent=1 // loop_body
      %s36 = ssub.s32 %s31, 1
      %s37 = ssub.s32 %s31, 2
      %s44 = sadd.s32 1, %s39
      %p45 = scmp.ge.s32.totalorder %s44, 1
      %s46 = scalar_select %p45, 0, %s44
      %s47 = sadd.s32 1, %s38
      %s48 = scalar_select %p45, %s47, %s38
      %p49 = scmp.ge.s32.totalorder %s48, 2
      %s50 = scalar_select %p49, 0, %s48
      %s51 = ssub.s32 %s38, %s50
      %s52 = ssub.s32 %s39, %s46
      %s53 = sor.u32 %s51, %s52
      %p54 = scmp.eq.s32.totalorder %s53, 0
      %s56 = sadd.s32 %s55, 1
      %s57 = scalar_select %p54, %s55, %s56
      %p60 = pneg %p54
      %p61 = scmp.eq.s32.totalorder %s31, 1
      %p62 = por %p60, %p61
      %p63 = scmp.ne.s32.totalorder %s55, %s58
      %p64 = scmp.eq.s32.totalorder %s31, 0
      %p65 = por %p63, %p64
      %p66 = scmp.ne.s32.totalorder %s55, %s58
      %p67 = scmp.eq.s32.totalorder %s36, 1
      %p68 = por %p66, %p67
      %p69 = scmp.ne.s32.totalorder %s58, %s59
      %p70 = scmp.eq.s32.totalorder %s36, 0
      %p71 = por %p69, %p70
      %p72 = scmp.ne.s32.totalorder %s58, %s59
      %p73 = scmp.eq.s32.totalorder %s37, 1
      %p74 = por %p72, %p73
      %p76 = scmp.ne.s32.totalorder %s59, %s75
      %p77 = scmp.eq.s32.totalorder %s37, 0
      %p78 = por %p76, %p77
      %s79 = ssub.s32 %s38, %s50
      %p80 = scmp.eq.s32.totalorder %s79, 0
      %s82 = sadd.s32 %s81, 1
      %s83 = scalar_select %p80, %s81, %s82
      %p86 = pneg %p80
      %p87 = scmp.eq.s32.totalorder %s31, 1
      %p88 = por %p86, %p87
      %p89 = scmp.ne.s32.totalorder %s81, %s84
      %p90 = scmp.eq.s32.totalorder %s31, 0
      %p91 = por %p89, %p90
      %p92 = scmp.ne.s32.totalorder %s81, %s84
      %p93 = scmp.eq.s32.totalorder %s36, 1
      %p94 = por %p92, %p93
      %p95 = scmp.ne.s32.totalorder %s84, %s85
      %p96 = scmp.eq.s32.totalorder %s36, 0
      %p97 = por %p95, %p96
      %p98 = scmp.ne.s32.totalorder %s84, %s85
      %p99 = scmp.eq.s32.totalorder %s37, 1
      %p100 = por %p98, %p99
      %p102 = scmp.ne.s32.totalorder %s85, %s101
      %p103 = scmp.eq.s32.totalorder %s37, 0
      %p104 = por %p102, %p103
      %s105 = ssub.s32 %s38, %s50
      %p106 = scmp.eq.s32.totalorder %s105, 0
      %s108 = sadd.s32 %s107, 1
      %s109 = scalar_select %p106, %s107, %s108
      %p112 = pneg %p106
      %p113 = scmp.eq.s32.totalorder %s31, 1
      %p114 = por %p112, %p113
      %p115 = scmp.ne.s32.totalorder %s107, %s110
      %p116 = scmp.eq.s32.totalorder %s31, 0
      %p117 = por %p115, %p116
      %p118 = scmp.ne.s32.totalorder %s107, %s110
      %p119 = scmp.eq.s32.totalorder %s36, 1
      %p120 = por %p118, %p119
      %p121 = scmp.ne.s32.totalorder %s110, %s111
      %p122 = scmp.eq.s32.totalorder %s36, 0
      %p123 = por %p121, %p122
      %p124 = scmp.ne.s32.totalorder %s110, %s111
      %p125 = scmp.eq.s32.totalorder %s37, 1
      %p126 = por %p124, %p125
      %p128 = scmp.ne.s32.totalorder %s111, %s127
      %p129 = scmp.eq.s32.totalorder %s37, 0
      %p130 = por %p128, %p129
      %s132 = sadd.s32 %s131, 1
      %p135 = scmp.eq.s32.totalorder %s31, 1
      %p136 = scmp.ne.s32.totalorder %s131, %s133
      %p137 = scmp.eq.s32.totalorder %s31, 0
      %p138 = por %p136, %p137
      %p139 = scmp.ne.s32.totalorder %s131, %s133
      %p140 = scmp.eq.s32.totalorder %s36, 1
      %p141 = por %p139, %p140
      %p142 = scmp.ne.s32.totalorder %s133, %s134
      %p143 = scmp.eq.s32.totalorder %s36, 0
      %p144 = por %p142, %p143
      %p145 = scmp.ne.s32.totalorder %s133, %s134
      %p146 = scmp.eq.s32.totalorder %s37, 1
      %p147 = por %p145, %p146
      %p149 = scmp.ne.s32.totalorder %s134, %s148
      %p150 = scmp.eq.s32.totalorder %s37, 0
      %p151 = por %p149, %p150
      %s153 = sadd.s32 %s152, 1
      %p156 = scmp.eq.s32.totalorder %s31, 1
      %p157 = scmp.ne.s32.totalorder %s152, %s154
      %p158 = scmp.eq.s32.totalorder %s31, 0
      %p159 = por %p157, %p158
      %p160 = scmp.ne.s32.totalorder %s152, %s154
      %p161 = scmp.eq.s32.totalorder %s36, 1
      %p162 = por %p160, %p161
      %p163 = scmp.ne.s32.totalorder %s154, %s155
      %p164 = scmp.eq.s32.totalorder %s36, 0
      %p165 = por %p163, %p164
      %p166 = scmp.ne.s32.totalorder %s154, %s155
      %p167 = scmp.eq.s32.totalorder %s37, 1
      %p168 = por %p166, %p167
      %p170 = scmp.ne.s32.totalorder %s155, %s169
      %p171 = scmp.eq.s32.totalorder %s37, 0
      %p172 = por %p170, %p171
      %s174 = sadd.s32 %s173, 1
      %p177 = scmp.eq.s32.totalorder %s31, 1
      %p178 = scmp.ne.s32.totalorder %s173, %s175
      %p179 = scmp.eq.s32.totalorder %s31, 0
      %p180 = por %p178, %p179
      %p181 = scmp.ne.s32.totalorder %s173, %s175
      %p182 = scmp.eq.s32.totalorder %s36, 1
      %p183 = por %p181, %p182
      %p184 = scmp.ne.s32.totalorder %s175, %s176
      %p185 = scmp.eq.s32.totalorder %s36, 0
      %p186 = por %p184, %p185
      %p187 = scmp.ne.s32.totalorder %s175, %s176
      %p188 = scmp.eq.s32.totalorder %s37, 1
      %p189 = por %p187, %p188
      %p191 = scmp.ne.s32.totalorder %s176, %s190
      %p192 = scmp.eq.s32.totalorder %s37, 0
      %p193 = por %p191, %p192
      %s195 = sadd.s32 %s194, 1
      %p198 = scmp.eq.s32.totalorder %s31, 1
      %p199 = scmp.ne.s32.totalorder %s194, %s196
      %p200 = scmp.eq.s32.totalorder %s31, 0
      %p201 = por %p199, %p200
      %p202 = scmp.ne.s32.totalorder %s194, %s196
      %p203 = scmp.eq.s32.totalorder %s36, 1
      %p204 = por %p202, %p203
      %p205 = scmp.ne.s32.totalorder %s196, %s197
      %p206 = scmp.eq.s32.totalorder %s36, 0
      %p207 = por %p205, %p206
      %p208 = scmp.ne.s32.totalorder %s196, %s197
      %p209 = scmp.eq.s32.totalorder %s37, 1
      %p210 = por %p208, %p209
      %p212 = scmp.ne.s32.totalorder %s197, %s211
      %p213 = scmp.eq.s32.totalorder %s37, 0
      %p214 = por %p212, %p213
      %s216 = sadd.s32 %s215, 1
      %p219 = scmp.eq.s32.totalorder %s31, 1
      %p220 = scmp.ne.s32.totalorder %s215, %s217
      %p221 = scmp.eq.s32.totalorder %s31, 0
      %p222 = por %p220, %p221
      %p223 = scmp.ne.s32.totalorder %s215, %s217
      %p224 = scmp.eq.s32.totalorder %s36, 1
      %p225 = por %p223, %p224
      %p226 = scmp.ne.s32.totalorder %s217, %s218
      %p227 = scmp.eq.s32.totalorder %s36, 0
      %p228 = por %p226, %p227
      %p229 = scmp.ne.s32.totalorder %s217, %s218
      %p230 = scmp.eq.s32.totalorder %s37, 1
      %p231 = por %p229, %p230
      %p233 = scmp.ne.s32.totalorder %s218, %s232
      %p234 = scmp.eq.s32.totalorder %s37, 0
      %p235 = por %p233, %p234
      %s237 = sadd.s32 %s236, 1
      %p240 = scmp.eq.s32.totalorder %s31, 1
      %p241 = scmp.ne.s32.totalorder %s236, %s238
      %p242 = scmp.eq.s32.totalorder %s31, 0
      %p243 = por %p241, %p242
      %p244 = scmp.ne.s32.totalorder %s236, %s238
      %p245 = scmp.eq.s32.totalorder %s36, 1
      %p246 = por %p244, %p245
      %p247 = scmp.ne.s32.totalorder %s238, %s239
      %p248 = scmp.eq.s32.totalorder %s36, 0
      %p249 = por %p247, %p248
      %p250 = scmp.ne.s32.totalorder %s238, %s239
      %p251 = scmp.eq.s32.totalorder %s37, 1
      %p252 = por %p250, %p251
      %p254 = scmp.ne.s32.totalorder %s239, %s253
      %p255 = scmp.eq.s32.totalorder %s37, 0
      %p256 = por %p254, %p255
      %s257 = ssub.s32 %s38, %s50
      %s258 = ssub.s32 %s39, %s46
      %s259 = sor.u32 %s257, %s258
      %p260 = scmp.eq.s32.totalorder %s259, 0
      %s262 = sadd.s32 %s261, 1
      %s263 = scalar_select %p260, %s261, %s262
      %p266 = pneg %p260
      %p267 = scmp.eq.s32.totalorder %s31, 1
      %p268 = por %p266, %p267
      %p269 = scmp.ne.s32.totalorder %s261, %s264
      %p270 = scmp.eq.s32.totalorder %s31, 0
      %p271 = por %p269, %p270
      %p272 = scmp.ne.s32.totalorder %s261, %s264
      %p273 = scmp.eq.s32.totalorder %s36, 1
      %p274 = por %p272, %p273
      %p275 = scmp.ne.s32.totalorder %s264, %s265
      %p276 = scmp.eq.s32.totalorder %s36, 0
      %p277 = por %p275, %p276
      %p278 = scmp.ne.s32.totalorder %s264, %s265
      %p279 = scmp.eq.s32.totalorder %s37, 1
      %p280 = por %p278, %p279
      %p282 = scmp.ne.s32.totalorder %s265, %s281
      %p283 = scmp.eq.s32.totalorder %s37, 0
      %p284 = por %p282, %p283
      %s285 = ssub.s32 %s38, %s50
      %s286 = ssub.s32 %s39, %s46
      %s287 = sor.u32 %s285, %s286
      %p288 = scmp.eq.s32.totalorder %s287, 0
      %s290 = sadd.s32 %s289, 1
      %s291 = scalar_select %p288, %s289, %s290
      %p294 = pneg %p288
      %p295 = scmp.eq.s32.totalorder %s31, 1
      %p296 = por %p294, %p295
      %p297 = scmp.ne.s32.totalorder %s289, %s292
      %p298 = scmp.eq.s32.totalorder %s31, 0
      %p299 = por %p297, %p298
      %p300 = scmp.ne.s32.totalorder %s289, %s292
      %p301 = scmp.eq.s32.totalorder %s36, 1
      %p302 = por %p300, %p301
      %p303 = scmp.ne.s32.totalorder %s292, %s293
      %p304 = scmp.eq.s32.totalorder %s36, 0
      %p305 = por %p303, %p304
      %p306 = scmp.ne.s32.totalorder %s292, %s293
      %p307 = scmp.eq.s32.totalorder %s37, 1
      %p308 = por %p306, %p307
      %p310 = scmp.ne.s32.totalorder %s293, %s309
      %p311 = scmp.eq.s32.totalorder %s37, 0
      %p312 = por %p310, %p311
      %p313 = scmp.le.s32.totalorder 1, %s31
      %p314 = scmp.lt.s32.totalorder %s31, 3
      %p315 = pnand %p313, %p314
      %p316 = pneg %p315
      // Predicated region
      $region9: #{tpu_custom_call.1} parent=5 // pred_check
        _
      $region10: #{tpu_custom_call.1} parent=5 // pred_check_branch
        %318 = sbr.rel (%p315) target = $region12
      $region11: #{tpu_custom_call.1} parent=5 // pred_region
        %s319 = ssub.s32 %s31, 1
        // Predicated region
        $region13: #{tpu_custom_call.1} parent=11 // pred_check
          %p320 = pneg %p144
        $region14: #{tpu_custom_call.1} parent=11 // pred_check_branch
          %322 = sbr.rel (%p320) target = $region16
        $region15: #{tpu_custom_call.1} parent=11 // pred_region
          %324 = vsyncadd [#allocation9], 0
          %s325 = sshll.u32 %s3, 4
          %s326 = int_to_ptr.hbm [resolvable:$true] %s325
          %s327 = sshll.u32 [#allocation8], 4
          %s328 = int_to_ptr.vmem [resolvable:$true] %s327
          %333 = dma.hbm_to_vmem [thread:$0]  %s326, 512, %s328, [#allocation9], 128, 128, 8
        $region16: #{tpu_custom_call.1} parent=11 // pred_fallthru
          _
        // Predicated region
        $region17: #{tpu_custom_call.1} parent=11 // pred_check
          %p334 = pneg %p165
        $region18: #{tpu_custom_call.1} parent=11 // pred_check_branch
          %336 = sbr.rel (%p334) target = $region20
        $region19: #{tpu_custom_call.1} parent=11 // pred_region
          %338 = vsyncadd [#allocation9], 0
          %s339 = sshll.u32 %s4, 4
          %s340 = int_to_ptr.hbm [resolvable:$true] %s339
          %s341 = sshll.u32 [#allocation10], 4
          %s342 = int_to_ptr.vmem [resolvable:$true] %s341
          %347 = dma.hbm_to_vmem [thread:$0]  %s340, 512, %s342, [#allocation9], 128, 128, 8
        $region20: #{tpu_custom_call.1} parent=11 // pred_fallthru
          _
        // Predicated region
        $region21: #{tpu_custom_call.1} parent=11 // pred_check
          %p348 = pneg %p186
        $region22: #{tpu_custom_call.1} parent=11 // pred_check_branch
          %350 = sbr.rel (%p348) target = $region24
        $region23: #{tpu_custom_call.1} parent=11 // pred_region
          %352 = vsyncadd [#allocation12], 0
          %s353 = sshll.u32 %s5, 4
          %s354 = int_to_ptr.hbm [resolvable:$true] %s353
          %s355 = sshll.u32 [#allocation11], 4
          %s356 = int_to_ptr.vmem [resolvable:$true] %s355
          %361 = dma.hbm_to_vmem [thread:$0]  %s354, 512, %s356, [#allocation12], 128, 128, 8
        $region24: #{tpu_custom_call.1} parent=11 // pred_fallthru
          _
        // Predicated region
        $region25: #{tpu_custom_call.1} parent=11 // pred_check
          %p362 = pneg %p207
        $region26: #{tpu_custom_call.1} parent=11 // pred_check_branch
          %364 = sbr.rel (%p362) target = $region28
        $region27: #{tpu_custom_call.1} parent=11 // pred_region
          _
        $region28: #{tpu_custom_call.1} parent=11 // pred_fallthru
          _
        // Predicated region
        $region29: #{tpu_custom_call.1} parent=11 // pred_check
          %p365 = pneg %p228
        $region30: #{tpu_custom_call.1} parent=11 // pred_check_branch
          %367 = sbr.rel (%p365) target = $region32
        $region31: #{tpu_custom_call.1} parent=11 // pred_region
          _
        $region32: #{tpu_custom_call.1} parent=11 // pred_fallthru
          _
        // Predicated region
        $region33: #{tpu_custom_call.1} parent=11 // pred_check
          %p368 = pneg %p249
        $region34: #{tpu_custom_call.1} parent=11 // pred_check_branch
          %370 = sbr.rel (%p368) target = $region36
        $region35: #{tpu_custom_call.1} parent=11 // pred_region
          _
        $region36: #{tpu_custom_call.1} parent=11 // pred_fallthru
          _
      $region12: #{tpu_custom_call.1} parent=5 // pred_fallthru
        _
      %p371 = scmp.lt.s32.totalorder %s31, 2
      // Predicated region
      $region37: #{tpu_custom_call.1} parent=5 // pred_check
        %p372 = pneg %p371
      $region38: #{tpu_custom_call.1} parent=5 // pred_check_branch
        %374 = sbr.rel (%p372) target = $region40
      $region39: #{tpu_custom_call.1} parent=5 // pred_region
        // Predicated region
        $region41: #{tpu_custom_call.1} parent=39 // pred_check
          %p375 = pneg %p65
        $region42: #{tpu_custom_call.1} parent=39 // pred_check_branch
          %377 = sbr.rel (%p375) target = $region44
        $region43: #{tpu_custom_call.1} parent=39 // pred_region
          %s378 = sand.u32 %s55, 1
          %s379 = scalar_lea.sflag [#allocation3], %s378
          %s380 = sand.u32 %s55, 1
          %s381 = smul.addr %s380, 8
          %s382 = scalar_lea.vmem [#allocation2], %s381
          %384 = vsyncadd %s379, 0
          %s385 = sadd.s32 %s39, %s38
          %s386 = smul.addr %s385, 8
          %s387 = scalar_lea.hbm %s0, %s386
          %s389 = sshll.u32 %s387, 4
          %s390 = int_to_ptr.hbm [resolvable:$true] %s389
          %s391 = sshll.u32 %s382, 4
          %s392 = int_to_ptr.vmem [resolvable:$true] %s391
          %394 = dma.hbm_to_vmem [thread:$0]  %s390, 128, %s392, %s379
        $region44: #{tpu_custom_call.1} parent=39 // pred_fallthru
          _
        // Predicated region
        $region45: #{tpu_custom_call.1} parent=39 // pred_check
          %p395 = pneg %p91
        $region46: #{tpu_custom_call.1} parent=39 // pred_check_branch
          %397 = sbr.rel (%p395) target = $region48
        $region47: #{tpu_custom_call.1} parent=39 // pred_region
          %s398 = sand.u32 %s31, 1
          %s399 = scalar_lea.sflag [#allocation6], %s398
          %s400 = sand.u32 %s81, 1
          %s401 = smul.addr %s400, 8
          %s402 = scalar_lea.vmem [#allocation5], %s401
          %404 = vsyncadd %s399, 0
          %s405 = smul.addr %s38, 8
          %s406 = scalar_lea.hbm %s1, %s405
          %s408 = sshll.u32 %s406, 4
          %s409 = int_to_ptr.hbm [resolvable:$true] %s408
          %s410 = sshll.u32 %s402, 4
          %s411 = int_to_ptr.vmem [resolvable:$true] %s410
          %413 = dma.hbm_to_vmem [thread:$0]  %s409, 128, %s411, %s399
        $region48: #{tpu_custom_call.1} parent=39 // pred_fallthru
          _
        // Predicated region
        $region49: #{tpu_custom_call.1} parent=39 // pred_check
          %p414 = pneg %p117
        $region50: #{tpu_custom_call.1} parent=39 // pred_check_branch
          %416 = sbr.rel (%p414) target = $region52
        $region51: #{tpu_custom_call.1} parent=39 // pred_region
          %s417 = sand.u32 %s31, 1
          %s418 = scalar_lea.sflag [#allocation6], %s417
          %s419 = sand.u32 %s107, 1
          %s420 = smul.addr %s419, 8
          %s421 = scalar_lea.vmem [#allocation7], %s420
          %423 = vsyncadd %s418, 0
          %s424 = smul.addr %s38, 8
          %s425 = scalar_lea.hbm %s2, %s424
          %s427 = sshll.u32 %s425, 4
          %s428 = int_to_ptr.hbm [resolvable:$true] %s427
          %s429 = sshll.u32 %s421, 4
          %s430 = int_to_ptr.vmem [resolvable:$true] %s429
          %432 = dma.hbm_to_vmem [thread:$0]  %s428, 128, %s430, %s418
        $region52: #{tpu_custom_call.1} parent=39 // pred_fallthru
          _
      $region40: #{tpu_custom_call.1} parent=5 // pred_fallthru
        _
      %p433 = scmp.le.s32.totalorder 1, %s31
      %p434 = scmp.lt.s32.totalorder %s31, 3
      %p435 = pnand %p433, %p434
      %p436 = pneg %p435
      // Predicated region
      $region53: #{tpu_custom_call.1} parent=5 // pred_check
        _
      $region54: #{tpu_custom_call.1} parent=5 // pred_check_branch
        %438 = sbr.rel (%p435) target = $region56
      $region55: #{tpu_custom_call.1} parent=5 // pred_region
        %s439 = ssub.s32 %s31, 1
        %s440 = sand.u32 %s58, 1
        %s441 = scalar_lea.sflag [#allocation3], %s440
        %s442 = sand.u32 %s58, 1
        %s443 = smul.addr %s442, 8
        %s444 = scalar_lea.vmem [#allocation2], %s443
        // Predicated region
        $region57: #{tpu_custom_call.1} parent=55 // pred_check
          %p445 = pneg %p71
        $region58: #{tpu_custom_call.1} parent=55 // pred_check_branch
          %447 = sbr.rel (%p445) target = $region60
        $region59: #{tpu_custom_call.1} parent=55 // pred_region
          %449 = dma.done %s441, 128
        $region60: #{tpu_custom_call.1} parent=55 // pred_fallthru
          _
        %s450 = sand.u32 %s36, 1
        %s451 = scalar_lea.sflag [#allocation6], %s450
        %s452 = sand.u32 %s84, 1
        %s453 = smul.addr %s452, 8
        %s454 = scalar_lea.vmem [#allocation5], %s453
        // Predicated region
        $region61: #{tpu_custom_call.1} parent=55 // pred_check
          %p455 = pneg %p97
        $region62: #{tpu_custom_call.1} parent=55 // pred_check_branch
          %457 = sbr.rel (%p455) target = $region64
        $region63: #{tpu_custom_call.1} parent=55 // pred_region
          %459 = dma.done %s451, 128
        $region64: #{tpu_custom_call.1} parent=55 // pred_fallthru
          _
        %s460 = sand.u32 %s36, 1
        %s461 = scalar_lea.sflag [#allocation6], %s460
        %s462 = sand.u32 %s110, 1
        %s463 = smul.addr %s462, 8
        %s464 = scalar_lea.vmem [#allocation7], %s463
        // Predicated region
        $region65: #{tpu_custom_call.1} parent=55 // pred_check
          %p465 = pneg %p123
        $region66: #{tpu_custom_call.1} parent=55 // pred_check_branch
          %467 = sbr.rel (%p465) target = $region68
        $region67: #{tpu_custom_call.1} parent=55 // pred_region
          %469 = dma.done %s461, 128
        $region68: #{tpu_custom_call.1} parent=55 // pred_fallthru
          _
        // Predicated region
        $region69: #{tpu_custom_call.1} parent=55 // pred_check
          %p470 = pneg %p144
        $region70: #{tpu_custom_call.1} parent=55 // pred_check_branch
          %472 = sbr.rel (%p470) target = $region72
        $region71: #{tpu_custom_call.1} parent=55 // pred_region
          %474 = dma.done [#allocation9], 512
        $region72: #{tpu_custom_call.1} parent=55 // pred_fallthru
          _
        // Predicated region
        $region73: #{tpu_custom_call.1} parent=55 // pred_check
          %p475 = pneg %p165
        $region74: #{tpu_custom_call.1} parent=55 // pred_check_branch
          %477 = sbr.rel (%p475) target = $region76
        $region75: #{tpu_custom_call.1} parent=55 // pred_region
          %479 = dma.done [#allocation9], 512
        $region76: #{tpu_custom_call.1} parent=55 // pred_fallthru
          _
        // Predicated region
        $region77: #{tpu_custom_call.1} parent=55 // pred_check
          %p480 = pneg %p186
        $region78: #{tpu_custom_call.1} parent=55 // pred_check_branch
          %482 = sbr.rel (%p480) target = $region80
        $region79: #{tpu_custom_call.1} parent=55 // pred_region
          %484 = dma.done [#allocation12], 512
        $region80: #{tpu_custom_call.1} parent=55 // pred_fallthru
          _
        %s485 = sand.u32 %s58, 1
        %s486 = scalar_lea.sflag [#allocation3], %s485
        %s487 = sand.u32 %s58, 1
        %s488 = smul.addr %s487, 8
        %s489 = scalar_lea.vmem [#allocation2], %s488
        %p490 = pneg %p71
        %p491 = pneg %p68
        %s492 = sand.u32 %s36, 1
        %s493 = scalar_lea.sflag [#allocation6], %s492
        %s494 = sand.u32 %s84, 1
        %s495 = smul.addr %s494, 8
        %s496 = scalar_lea.vmem [#allocation5], %s495
        %p497 = pneg %p97
        %p498 = pneg %p94
        %s499 = sand.u32 %s36, 1
        %s500 = scalar_lea.sflag [#allocation6], %s499
        %s501 = sand.u32 %s110, 1
        %s502 = smul.addr %s501, 8
        %s503 = scalar_lea.vmem [#allocation7], %s502
        %p504 = pneg %p123
        %p505 = pneg %p120
        %p506 = pneg %p144
        %p507 = pneg %p141
        %p508 = pneg %p165
        %p509 = pneg %p162
        %p510 = pneg %p186
        %p511 = pneg %p183
        %p512 = pneg %p207
        %p513 = pneg %p204
        %p514 = pneg %p228
        %p515 = pneg %p225
        %p516 = pneg %p249
        %p517 = pneg %p246
        %p518 = pneg %p277
        %p519 = pneg %p274
        %s520 = sand.u32 %s264, 1
        %s521 = scalar_lea.sflag [#allocation4], %s520
        %s522 = sand.u32 %s264, 1
        %s523 = smul.addr %s522, 8
        %s524 = scalar_lea.vmem [#allocation13], %s523
        %p525 = pneg %p305
        %p526 = pneg %p302
        %s527 = sand.u32 %s292, 1
        %s528 = scalar_lea.sflag [#allocation15], %s527
        %s529 = sand.u32 %s292, 1
        %s530 = smul.addr %s529, 32
        %s531 = scalar_lea.vmem [#allocation14], %s530
        %v532 = vld [vmem:[%s444] sm:$0xff]
        %v533 = vld [vmem:[%s454] sm:$0xff]
        %v534 = vld [vmem:[%s464] sm:$0xff]
        %v535 = vld [vmem:[#allocation8] sm:$0xff]
        %v536 = vld [vmem:[#allocation8 + $0x8] sm:$0xff]
        %v537 = vld [vmem:[#allocation8 + $0x10] sm:$0xff]
        %v538 = vld [vmem:[#allocation8 + $0x18] sm:$0xff]
        %v539 = vld [vmem:[%s6] sm:$0x1]
        %v541 = vperm.slane %v539, 0
        %vm543 = vcmask 261120
        %v545 = vsel %vm543, %v532, 0
        %547 = vmatpush.msra.mxu0 0.0
        %548 = vmatpush.msra.mxu0 0.0
        %549 = vmatpush.msra.mxu0 0.0
        %550 = vmatpush.msra.mxu0 0.0
        %551 = vmatpush.msra.mxu0 0.0
        %552 = vmatpush.msra.mxu0 0.0
        %553 = vmatpush.msra.mxu0 0.0
        %554 = vmatpush.msra.mxu0 0.0
        %555 = vmatpush.msra.mxu0 0.0
        %556 = vmatpush.msra.mxu0 0.0
        %557 = vmatpush.msra.mxu0 0.0
        %558 = vmatpush.msra.mxu0 0.0
        %559 = vmatpush.msra.mxu0 %v538
        %560 = vmatpush.msra.mxu0 %v537
        %561 = vmatpush.msra.mxu0 %v536
        %562 = vmatpush.msra.mxu0 %v535
        %563 = vmatmul.f32.gmra.mxu0 %v545
        %v564 = vpop.f32.mrf.mxu0
        %v565 = vadd.f32 %v541, %v564
        %566 = vdwg.mxu0
        %v567 = vld [vmem:[#allocation10] sm:$0xff]
        %v568 = vld [vmem:[#allocation10 + $0x8] sm:$0xff]
        %v569 = vld [vmem:[#allocation10 + $0x10] sm:$0xff]
        %v570 = vld [vmem:[#allocation10 + $0x18] sm:$0xff]
        %v571 = vld [vmem:[%s7] sm:$0x1]
        %v573 = vperm.slane %v571, 0
        %v576 = vsel %vm543, %v533, 0
        %578 = vmatpush.msra.mxu0 0.0
        %579 = vmatpush.msra.mxu0 0.0
        %580 = vmatpush.msra.mxu0 0.0
        %581 = vmatpush.msra.mxu0 0.0
        %582 = vmatpush.msra.mxu0 0.0
        %583 = vmatpush.msra.mxu0 0.0
        %584 = vmatpush.msra.mxu0 0.0
        %585 = vmatpush.msra.mxu0 0.0
        %586 = vmatpush.msra.mxu0 0.0
        %587 = vmatpush.msra.mxu0 0.0
        %588 = vmatpush.msra.mxu0 0.0
        %589 = vmatpush.msra.mxu0 0.0
        %590 = vmatpush.msra.mxu0 %v570
        %591 = vmatpush.msra.mxu0 %v569
        %592 = vmatpush.msra.mxu0 %v568
        %593 = vmatpush.msra.mxu0 %v567
        %594 = vmatmul.f32.gmra.mxu0 %v576
        %v595 = vpop.f32.mrf.mxu0
        %v596 = vadd.f32 %v573, %v595
        %597 = vdwg.mxu0
        %v598 = vld [vmem:[#allocation11] sm:$0xff]
        %v599 = vld [vmem:[#allocation11 + $0x8] sm:$0xff]
        %v600 = vld [vmem:[#allocation11 + $0x10] sm:$0xff]
        %v601 = vld [vmem:[#allocation11 + $0x18] sm:$0xff]
        %v602 = vld [vmem:[%s8] sm:$0x1]
        %v604 = vperm.slane %v602, 0
        %v607 = vsel %vm543, %v534, 0
        %609 = vmatpush.msra.mxu0 0.0
        %610 = vmatpush.msra.mxu0 0.0
        %611 = vmatpush.msra.mxu0 0.0
        %612 = vmatpush.msra.mxu0 0.0
        %613 = vmatpush.msra.mxu0 0.0
        %614 = vmatpush.msra.mxu0 0.0
        %615 = vmatpush.msra.mxu0 0.0
        %616 = vmatpush.msra.mxu0 0.0
        %617 = vmatpush.msra.mxu0 0.0
        %618 = vmatpush.msra.mxu0 0.0
        %619 = vmatpush.msra.mxu0 0.0
        %620 = vmatpush.msra.mxu0 0.0
        %621 = vmatpush.msra.mxu0 %v601
        %622 = vmatpush.msra.mxu0 %v600
        %623 = vmatpush.msra.mxu0 %v599
        %624 = vmatpush.msra.mxu0 %v598
        %625 = vmatmul.f32.gmra.mxu0 %v607
        %v626 = vpop.f32.mrf.mxu0
        %v627 = vadd.f32 %v604, %v626
        %628 = vdwg.mxu0
        %vm629 = vcmask 64512
        %v631 = vsel %vm629, %v565, 0
        %v634 = vsel %vm629, %v596, 0
        %636 = vmatpush.xpose.msra.mxu0 0.0
        %637 = vmatpush.xpose.msra.mxu0 0.0
        %638 = vmatpush.xpose.msra.mxu0 0.0
        %639 = vmatpush.xpose.msra.mxu0 0.0
        %640 = vmatpush.xpose.msra.mxu0 0.0
        %641 = vmatpush.xpose.msra.mxu0 0.0
        %642 = vmatpush.xpose.msra.mxu0 0.0
        %643 = vmatpush.xpose.msra.mxu0 0.0
        %644 = vmatpush.xpose.msra.mxu0 0.0
        %645 = vmatpush.xpose.msra.mxu0 0.0
        %646 = vmatpush.xpose.msra.mxu0 0.0
        %647 = vmatpush.xpose.msra.mxu0 0.0
        %648 = vmatpush.xpose.msra.mxu0 0.0
        %649 = vmatpush.xpose.msra.mxu0 0.0
        %650 = vmatpush.xpose.msra.mxu0 0.0
        %651 = vmatpush.xpose.msra.mxu0 %v634
        %652 = vmatmul.f32.gmra.mxu0 %v631
        %v653 = vpop.f32.mrf.mxu0
        %v654 = vadd.f32 0.0, %v653
        %655 = vdwg.mxu0
        %v656 = vsel %vm629, %v654, -inf
        %657 = vmax.xlane.f32.xlu0 %v656
        %v658 = vpop.xlane.xlu0 %657
        %v659 = vsub.f32 %v654, %v658
        %v660 = vmul.f32 %v659, 1.442695
        %v661 = vpow.pop %v660
        %v662 = vsel %vm629, %v661, 0.0
        %663 = vadd.xlane.f32.xlu0 %v662
        %v664 = vpop.xlane.xlu0 %663
        %v665 = vrcp.pop %v664
        %v666 = vmul.f32 %v664, %v665
        %v667 = vsub.f32 1.0, %v666
        %v668 = vmul.f32 %v665, %v667
        %v669 = vadd.f32 %v665, %v668
        %vm670 = vweird.f32 %v664
        %vm671 = vweird.f32 %v665
        %vm672 = vmor %vm670, %vm671
        %v673 = vsel %vm672, %v665, %v669
        %v674 = vand.u32 2147483647, %v664
        %vm675 = vcmp.eq.f32.partialorder %v674, 8.507059e+37
        %v676 = vand.u32 %v664, 2147483648
        %v677 = vor.u32 1.1754944e-38, %v676
        %v678 = vsel %vm675, %v677, %v673
        %v679 = vmul.f32 %v661, %v678
        %v681 = vsel %vm629, %v679, 0
        %683 = vmatpush.msra.mxu0 0.0
        %684 = vmatpush.msra.mxu0 0.0
        %685 = vmatpush.msra.mxu0 0.0
        %686 = vmatpush.msra.mxu0 0.0
        %687 = vmatpush.msra.mxu0 0.0
        %688 = vmatpush.msra.mxu0 0.0
        %689 = vmatpush.msra.mxu0 0.0
        %690 = vmatpush.msra.mxu0 0.0
        %691 = vmatpush.msra.mxu0 0.0
        %692 = vmatpush.msra.mxu0 0.0
        %693 = vmatpush.msra.mxu0 0.0
        %694 = vmatpush.msra.mxu0 0.0
        %695 = vmatpush.msra.mxu0 0.0
        %696 = vmatpush.msra.mxu0 0.0
        %697 = vmatpush.msra.mxu0 0.0
        %698 = vmatpush.msra.mxu0 %v627
        %699 = vmatmul.f32.gmra.mxu0 %v681
        %v700 = vpop.f32.mrf.mxu0
        %v701 = vadd.f32 0.0, %v700
        %702 = vdwg.mxu0
        %703 = vst.msk [vmem:[%s524] sm:$0xff] %vm629, %v701
        %704 = vst.msk [vmem:[%s531] sm:$0xff] %vm629, %v679
        %705 = vrot.lane.b32.xlu0 %v565, 120
        %v706 = vpop.permute.xlu0 %705
        %707 = vrot.lane.b32.xlu0 %v596, 120
        %v708 = vpop.permute.xlu0 %707
        %v709 = vsel %vm629, %v706, 0
        %v711 = vsel %vm629, %v708, 0
        %713 = vmatpush.xpose.msra.mxu0 0.0
        %714 = vmatpush.xpose.msra.mxu0 0.0
        %715 = vmatpush.xpose.msra.mxu0 0.0
        %716 = vmatpush.xpose.msra.mxu0 0.0
        %717 = vmatpush.xpose.msra.mxu0 0.0
        %718 = vmatpush.xpose.msra.mxu0 0.0
        %719 = vmatpush.xpose.msra.mxu0 0.0
        %720 = vmatpush.xpose.msra.mxu0 0.0
        %721 = vmatpush.xpose.msra.mxu0 0.0
        %722 = vmatpush.xpose.msra.mxu0 0.0
        %723 = vmatpush.xpose.msra.mxu0 0.0
        %724 = vmatpush.xpose.msra.mxu0 0.0
        %725 = vmatpush.xpose.msra.mxu0 0.0
        %726 = vmatpush.xpose.msra.mxu0 0.0
        %727 = vmatpush.xpose.msra.mxu0 0.0
        %728 = vmatpush.xpose.msra.mxu0 %v711
        %729 = vmatmul.f32.gmra.mxu0 %v709
        %v730 = vpop.f32.mrf.mxu0
        %v731 = vadd.f32 0.0, %v730
        %732 = vdwg.mxu0
        %v733 = vsel %vm629, %v731, -inf
        %734 = vmax.xlane.f32.xlu0 %v733
        %v735 = vpop.xlane.xlu0 %734
        %v736 = vsub.f32 %v731, %v735
        %v737 = vmul.f32 %v736, 1.442695
        %v738 = vpow.pop %v737
        %v739 = vsel %vm629, %v738, 0.0
        %740 = vadd.xlane.f32.xlu0 %v739
        %v741 = vpop.xlane.xlu0 %740
        %v742 = vrcp.pop %v741
        %v743 = vmul.f32 %v741, %v742
        %v744 = vsub.f32 1.0, %v743
        %v745 = vmul.f32 %v742, %v744
        %v746 = vadd.f32 %v742, %v745
        %vm747 = vweird.f32 %v741
        %vm748 = vweird.f32 %v742
        %vm749 = vmor %vm747, %vm748
        %v750 = vsel %vm749, %v742, %v746
        %v751 = vand.u32 2147483647, %v741
        %vm752 = vcmp.eq.f32.partialorder %v751, 8.507059e+37
        %v753 = vand.u32 %v741, 2147483648
        %v754 = vor.u32 1.1754944e-38, %v753
        %v755 = vsel %vm752, %v754, %v750
        %v756 = vmul.f32 %v738, %v755
        %758 = vrot.lane.b32.xlu0 %v627, 120
        %v759 = vpop.permute.xlu0 %758
        %v762 = vsel %vm629, %v756, 0
        %764 = vmatpush.msra.mxu0 0.0
        %765 = vmatpush.msra.mxu0 0.0
        %766 = vmatpush.msra.mxu0 0.0
        %767 = vmatpush.msra.mxu0 0.0
        %768 = vmatpush.msra.mxu0 0.0
        %769 = vmatpush.msra.mxu0 0.0
        %770 = vmatpush.msra.mxu0 0.0
        %771 = vmatpush.msra.mxu0 0.0
        %772 = vmatpush.msra.mxu0 0.0
        %773 = vmatpush.msra.mxu0 0.0
        %774 = vmatpush.msra.mxu0 0.0
        %775 = vmatpush.msra.mxu0 0.0
        %776 = vmatpush.msra.mxu0 0.0
        %777 = vmatpush.msra.mxu0 0.0
        %778 = vmatpush.msra.mxu0 0.0
        %779 = vmatpush.msra.mxu0 %v759
        %780 = vmatmul.f32.gmra.mxu0 %v762
        %v781 = vpop.f32.mrf.mxu0
        %v782 = vadd.f32 0.0, %v781
        %783 = vdwg.mxu0
        %785 = vrot.lane.b32.xlu0 %v782, 8
        %v786 = vpop.permute.xlu0 %785
        %vm788 = vcmask 130112
        %789 = vst.msk [vmem:[%s524] sm:$0xff] %vm788, %v786
        %s790 = scalar_lea.vmem %s531, 8 [#allocation14]
        %791 = vst.msk [vmem:[%s790] sm:$0xff] %vm629, %v756
        %792 = vrot.lane.b32.xlu0 %v565, 112
        %v793 = vpop.permute.xlu0 %792
        %794 = vrot.lane.b32.xlu0 %v596, 112
        %v795 = vpop.permute.xlu0 %794
        %v796 = vsel %vm629, %v793, 0
        %v798 = vsel %vm629, %v795, 0
        %800 = vmatpush.xpose.msra.mxu0 0.0
        %801 = vmatpush.xpose.msra.mxu0 0.0
        %802 = vmatpush.xpose.msra.mxu0 0.0
        %803 = vmatpush.xpose.msra.mxu0 0.0
        %804 = vmatpush.xpose.msra.mxu0 0.0
        %805 = vmatpush.xpose.msra.mxu0 0.0
        %806 = vmatpush.xpose.msra.mxu0 0.0
        %807 = vmatpush.xpose.msra.mxu0 0.0
        %808 = vmatpush.xpose.msra.mxu0 0.0
        %809 = vmatpush.xpose.msra.mxu0 0.0
        %810 = vmatpush.xpose.msra.mxu0 0.0
        %811 = vmatpush.xpose.msra.mxu0 0.0
        %812 = vmatpush.xpose.msra.mxu0 0.0
        %813 = vmatpush.xpose.msra.mxu0 0.0
        %814 = vmatpush.xpose.msra.mxu0 0.0
        %815 = vmatpush.xpose.msra.mxu0 %v798
        %816 = vmatmul.f32.gmra.mxu0 %v796
        %v817 = vpop.f32.mrf.mxu0
        %v818 = vadd.f32 0.0, %v817
        %819 = vdwg.mxu0
        %v820 = vsel %vm629, %v818, -inf
        %821 = vmax.xlane.f32.xlu0 %v820
        %v822 = vpop.xlane.xlu0 %821
        %v823 = vsub.f32 %v818, %v822
        %v824 = vmul.f32 %v823, 1.442695
        %v825 = vpow.pop %v824
        %v826 = vsel %vm629, %v825, 0.0
        %827 = vadd.xlane.f32.xlu0 %v826
        %v828 = vpop.xlane.xlu0 %827
        %v829 = vrcp.pop %v828
        %v830 = vmul.f32 %v828, %v829
        %v831 = vsub.f32 1.0, %v830
        %v832 = vmul.f32 %v829, %v831
        %v833 = vadd.f32 %v829, %v832
        %vm834 = vweird.f32 %v828
        %vm835 = vweird.f32 %v829
        %vm836 = vmor %vm834, %vm835
        %v837 = vsel %vm836, %v829, %v833
        %v838 = vand.u32 2147483647, %v828
        %vm839 = vcmp.eq.f32.partialorder %v838, 8.507059e+37
        %v840 = vand.u32 %v828, 2147483648
        %v841 = vor.u32 1.1754944e-38, %v840
        %v842 = vsel %vm839, %v841, %v837
        %v843 = vmul.f32 %v825, %v842
        %844 = vrot.lane.b32.xlu0 %v627, 112
        %v845 = vpop.permute.xlu0 %844
        %v848 = vsel %vm629, %v843, 0
        %850 = vmatpush.msra.mxu0 0.0
        %851 = vmatpush.msra.mxu0 0.0
        %852 = vmatpush.msra.mxu0 0.0
        %853 = vmatpush.msra.mxu0 0.0
        %854 = vmatpush.msra.mxu0 0.0
        %855 = vmatpush.msra.mxu0 0.0
        %856 = vmatpush.msra.mxu0 0.0
        %857 = vmatpush.msra.mxu0 0.0
        %858 = vmatpush.msra.mxu0 0.0
        %859 = vmatpush.msra.mxu0 0.0
        %860 = vmatpush.msra.mxu0 0.0
        %861 = vmatpush.msra.mxu0 0.0
        %862 = vmatpush.msra.mxu0 0.0
        %863 = vmatpush.msra.mxu0 0.0
        %864 = vmatpush.msra.mxu0 0.0
        %865 = vmatpush.msra.mxu0 %v845
        %866 = vmatmul.f32.gmra.mxu0 %v848
        %v867 = vpop.f32.mrf.mxu0
        %v868 = vadd.f32 0.0, %v867
        %869 = vdwg.mxu0
        %871 = vrot.lane.b32.xlu0 %v868, 16
        %v872 = vpop.permute.xlu0 %871
        %vm874 = vcmask 195712
        %875 = vst.msk [vmem:[%s524] sm:$0xff] %vm874, %v872
        %s876 = scalar_lea.vmem %s531, 16 [#allocation14]
        %877 = vst.msk [vmem:[%s876] sm:$0xff] %vm629, %v843
        %878 = vrot.lane.b32.xlu0 %v565, 104
        %v879 = vpop.permute.xlu0 %878
        %880 = vrot.lane.b32.xlu0 %v596, 104
        %v881 = vpop.permute.xlu0 %880
        %v882 = vsel %vm629, %v879, 0
        %v884 = vsel %vm629, %v881, 0
        %886 = vmatpush.xpose.msra.mxu0 0.0
        %887 = vmatpush.xpose.msra.mxu0 0.0
        %888 = vmatpush.xpose.msra.mxu0 0.0
        %889 = vmatpush.xpose.msra.mxu0 0.0
        %890 = vmatpush.xpose.msra.mxu0 0.0
        %891 = vmatpush.xpose.msra.mxu0 0.0
        %892 = vmatpush.xpose.msra.mxu0 0.0
        %893 = vmatpush.xpose.msra.mxu0 0.0
        %894 = vmatpush.xpose.msra.mxu0 0.0
        %895 = vmatpush.xpose.msra.mxu0 0.0
        %896 = vmatpush.xpose.msra.mxu0 0.0
        %897 = vmatpush.xpose.msra.mxu0 0.0
        %898 = vmatpush.xpose.msra.mxu0 0.0
        %899 = vmatpush.xpose.msra.mxu0 0.0
        %900 = vmatpush.xpose.msra.mxu0 0.0
        %901 = vmatpush.xpose.msra.mxu0 %v884
        %902 = vmatmul.f32.gmra.mxu0 %v882
        %v903 = vpop.f32.mrf.mxu0
        %v904 = vadd.f32 0.0, %v903
        %905 = vdwg.mxu0
        %v906 = vsel %vm629, %v904, -inf
        %907 = vmax.xlane.f32.xlu0 %v906
        %v908 = vpop.xlane.xlu0 %907
        %v909 = vsub.f32 %v904, %v908
        %v910 = vmul.f32 %v909, 1.442695
        %v911 = vpow.pop %v910
        %v912 = vsel %vm629, %v911, 0.0
        %913 = vadd.xlane.f32.xlu0 %v912
        %v914 = vpop.xlane.xlu0 %913
        %v915 = vrcp.pop %v914
        %v916 = vmul.f32 %v914, %v915
        %v917 = vsub.f32 1.0, %v916
        %v918 = vmul.f32 %v915, %v917
        %v919 = vadd.f32 %v915, %v918
        %vm920 = vweird.f32 %v914
        %vm921 = vweird.f32 %v915
        %vm922 = vmor %vm920, %vm921
        %v923 = vsel %vm922, %v915, %v919
        %v924 = vand.u32 2147483647, %v914
        %vm925 = vcmp.eq.f32.partialorder %v924, 8.507059e+37
        %v926 = vand.u32 %v914, 2147483648
        %v927 = vor.u32 1.1754944e-38, %v926
        %v928 = vsel %vm925, %v927, %v923
        %v929 = vmul.f32 %v911, %v928
        %930 = vrot.lane.b32.xlu0 %v627, 104
        %v931 = vpop.permute.xlu0 %930
        %v934 = vsel %vm629, %v929, 0
        %936 = vmatpush.msra.mxu0 0.0
        %937 = vmatpush.msra.mxu0 0.0
        %938 = vmatpush.msra.mxu0 0.0
        %939 = vmatpush.msra.mxu0 0.0
        %940 = vmatpush.msra.mxu0 0.0
        %941 = vmatpush.msra.mxu0 0.0
        %942 = vmatpush.msra.mxu0 0.0
        %943 = vmatpush.msra.mxu0 0.0
        %944 = vmatpush.msra.mxu0 0.0
        %945 = vmatpush.msra.mxu0 0.0
        %946 = vmatpush.msra.mxu0 0.0
        %947 = vmatpush.msra.mxu0 0.0
        %948 = vmatpush.msra.mxu0 0.0
        %949 = vmatpush.msra.mxu0 0.0
        %950 = vmatpush.msra.mxu0 0.0
        %951 = vmatpush.msra.mxu0 %v931
        %952 = vmatmul.f32.gmra.mxu0 %v934
        %v953 = vpop.f32.mrf.mxu0
        %v954 = vadd.f32 0.0, %v953
        %955 = vdwg.mxu0
        %957 = vrot.lane.b32.xlu0 %v954, 24
        %v958 = vpop.permute.xlu0 %957
        %vm960 = vcmask 261312
        %961 = vst.msk [vmem:[%s524] sm:$0xff] %vm960, %v958
        %s962 = scalar_lea.vmem %s531, 24 [#allocation14]
        %963 = vst.msk [vmem:[%s962] sm:$0xff] %vm629, %v929
        %s964 = sand.u32 %s264, 1
        %s965 = scalar_lea.sflag [#allocation4], %s964
        %s966 = sand.u32 %s264, 1
        %s967 = smul.addr %s966, 8
        %s968 = scalar_lea.vmem [#allocation13], %s967
        %s969 = sand.u32 %s292, 1
        %s970 = scalar_lea.sflag [#allocation15], %s969
        %s971 = sand.u32 %s292, 1
        %s972 = smul.addr %s971, 32
        %s973 = scalar_lea.vmem [#allocation14], %s972
        // Predicated region
        $region81: #{tpu_custom_call.1} parent=55 // pred_check
          %p974 = pneg %p274
        $region82: #{tpu_custom_call.1} parent=55 // pred_check_branch
          %976 = sbr.rel (%p974) target = $region84
        $region83: #{tpu_custom_call.1} parent=55 // pred_region
          %978 = vsyncadd %s965, 0
          %s979 = sadd.s32 %s41, %s40
          %s980 = smul.addr %s979, 8
          %s981 = scalar_lea.hbm %s9, %s980
          %s983 = sshll.u32 %s968, 4
          %s984 = int_to_ptr.vmem [resolvable:$true] %s983
          %s985 = sshll.u32 %s981, 4
          %s986 = int_to_ptr.hbm [resolvable:$true] %s985
          %988 = dma.vmem_to_hbm [thread:$0]  %s984, 128, %s986, %s965
        $region84: #{tpu_custom_call.1} parent=55 // pred_fallthru
          _
        // Predicated region
        $region85: #{tpu_custom_call.1} parent=55 // pred_check
          %p989 = pneg %p302
        $region86: #{tpu_custom_call.1} parent=55 // pred_check_branch
          %991 = sbr.rel (%p989) target = $region88
        $region87: #{tpu_custom_call.1} parent=55 // pred_region
          %993 = vsyncadd %s970, 0
          %s994 = sadd.s32 %s41, %s40
          %s995 = smul.addr %s994, 8
          %s996 = scalar_lea.hbm %s10, %s995
          %s997 = sshll.u32 %s973, 4
          %s998 = int_to_ptr.vmem [resolvable:$true] %s997
          %s999 = sshll.u32 %s996, 4
          %s1000 = int_to_ptr.hbm [resolvable:$true] %s999
          %1005 = dma.vmem_to_hbm [thread:$0]  %s998, 512, %s1000, %s970, 128, 256, 8
        $region88: #{tpu_custom_call.1} parent=55 // pred_fallthru
          _
      $region56: #{tpu_custom_call.1} parent=5 // pred_fallthru
        _
      %p1006 = scmp.le.s32.totalorder 2, %s31
      // Predicated region
      $region89: #{tpu_custom_call.1} parent=5 // pred_check
        %p1007 = pneg %p1006
      $region90: #{tpu_custom_call.1} parent=5 // pred_check_branch
        %1009 = sbr.rel (%p1007) target = $region92
      $region91: #{tpu_custom_call.1} parent=5 // pred_region
        %s1010 = ssub.s32 %s31, 2
        // Predicated region
        $region93: #{tpu_custom_call.1} parent=91 // pred_check
          %p1011 = pneg %p280
        $region94: #{tpu_custom_call.1} parent=91 // pred_check_branch
          %1013 = sbr.rel (%p1011) target = $region96
        $region95: #{tpu_custom_call.1} parent=91 // pred_region
          %s1014 = sand.u32 %s265, 1
          %s1015 = scalar_lea.sflag [#allocation4], %s1014
          %s1016 = sand.u32 %s265, 1
          %s1017 = smul.addr %s1016, 8
          %s1018 = scalar_lea.vmem [#allocation13], %s1017
          %1020 = dma.done %s1015, 128
        $region96: #{tpu_custom_call.1} parent=91 // pred_fallthru
          _
        // Predicated region
        $region97: #{tpu_custom_call.1} parent=91 // pred_check
          %p1021 = pneg %p308
        $region98: #{tpu_custom_call.1} parent=91 // pred_check_branch
          %1023 = sbr.rel (%p1021) target = $region100
        $region99: #{tpu_custom_call.1} parent=91 // pred_region
          %s1024 = sand.u32 %s293, 1
          %s1025 = scalar_lea.sflag [#allocation15], %s1024
          %s1026 = sand.u32 %s293, 1
          %s1027 = smul.addr %s1026, 32
          %s1028 = scalar_lea.vmem [#allocation14], %s1027
          %1030 = dma.done %s1025, 512
        $region100: #{tpu_custom_call.1} parent=91 // pred_fallthru
          _
      $region92: #{tpu_custom_call.1} parent=5 // pred_fallthru
        _
    $region6: #{tpu_custom_call.1} parent=1 // loop_footer
      %s35 = sadd.s32 1, %s31
    $region7: #{tpu_custom_call.1} parent=1 // loop_footer_branch
      %30 = sbr.rel target = $region3
    $region8: #{tpu_custom_call.1} parent=1 // loop_exit
      _
    %1031 = vsyncpa [#allocation3], 1
    %s1032 = scalar_lea.sflag [#allocation3], 1
    %1033 = vsyncpa %s1032, 1
    %1034 = vsyncpa [#allocation6], 1
    %s1035 = scalar_lea.sflag [#allocation6], 1
    %1036 = vsyncpa %s1035, 1
    %1037 = vsyncpa [#allocation9], 1
    %1038 = vsyncpa [#allocation12], 1
    %1039 = vsyncpa [#allocation4], 1
    %s1040 = scalar_lea.sflag [#allocation4], 1
    %1041 = vsyncpa %s1040, 1
    %1042 = vsyncpa [#allocation15], 1
    %s1043 = scalar_lea.sflag [#allocation15], 1
    %1044 = vsyncpa %s1043, 1

</llo_original>
